<compile_context>
chip_gen: v6e
topology: v6e:2x2x1
jax: 0.10.0
libtpu: 0.0.40
codegen_flags: <defaults>
</compile_context>

<pallas_src>
import functools

import jax
import jax.numpy as jnp
from jax import lax
from jax.experimental import pallas as pl
from jax.experimental.pallas import tpu as pltpu


def poolformer_block_kernel(
    x_ref,      # (Bt, C, H*W) f32   pixel index n = h*W + w lives on the lane axis
    g1f_ref,    # (C, 1)  f32  = gamma1 * layer_scale_1
    b1f_ref,    # (C, 1)  f32  = beta1  * layer_scale_1
    w1t_ref,    # (Hd, C) bf16 = (gamma2[:, None] * W1).T          (fc1, norm2 affine folded)
    bf1f_ref,   # (Hd, 1) f32  = bfc1 + beta2 @ W1
    w2t_ref,    # (C, Hd) bf16 = (sr_scale * W2 * ls2[None, :]).T  (fc2, StarReLU scale + ls2 folded)
    bf2f_ref,   # (C, 1)  f32  = ls2 * (sr_bias * W2.sum(0) + bfc2)
    o_ref,      # (Bt, C, H*W) f32
    *, H, W,
):
    eps = 1e-5
    Bt, C, HW = x_ref.shape
    inv_n = 1.0 / float(C * HW)

    # ---- spatial edge masks + 1/count (count_include_pad=False), built once per grid step ----
    n_idx = lax.broadcasted_iota(jnp.int32, (1, HW), 1)          # lane index n = h*W + w
    w_idx = n_idx % W
    ml = jnp.where(w_idx > 0, 1.0, 0.0)                          # has a (w-1) neighbour
    mr = jnp.where(w_idx < W - 1, 1.0, 0.0)                      # has a (w+1) neighbour
    mu = jnp.where(n_idx >= W, 1.0, 0.0)                         # has a (h-1) neighbour
    md = jnp.where(n_idx < (H - 1) * W, 1.0, 0.0)                # has a (h+1) neighbour
    inv_cnt = 1.0 / ((1.0 + ml + mr) * (1.0 + mu + md))          # 1 / valid 3x3 window size

    g1f = g1f_ref[...]
    b1f = b1f_ref[...]
    bf1f = bf1f_ref[...]
    bf2f = bf2f_ref[...]
    w1t = w1t_ref[...]
    w2t = w2t_ref[...]

    for b in range(Bt):                                          # static unroll over images in the block
        x = x_ref[b].astype(jnp.float32)                         # (C, HW)

        # ---- norm1: GroupNorm(1, C) per image, one-pass stats; layer_scale_1 folded in ----
        s1 = jnp.sum(x)
        s2 = jnp.sum(x * x)
        mean1 = s1 * inv_n
        var1 = s2 * inv_n - mean1 * mean1
        xn = (x - mean1) * lax.rsqrt(var1 + eps) * g1f + b1f     # = ls1 * norm1(x)

        # ---- token mixer: AvgPool2d(3, 1, 1, count_include_pad=False)(xn) - xn ----
        # separable 3x3 sum: lane rolls (jnp.roll semantics: result[n] = x[n - shift]) + masks
        sw = xn + ml * pltpu.roll(xn, 1, axis=1) \
                + mr * pltpu.roll(xn, HW - 1, axis=1)            # W-direction sum
        s = sw + mu * pltpu.roll(sw, W, axis=1) \
               + md * pltpu.roll(sw, HW - W, axis=1)             # H-direction sum
        x1 = x + s * inv_cnt - xn                                # residual 1 (DropPath = identity)

        # ---- norm2 (affine folded into fc1), one-pass stats ----
        t1 = jnp.sum(x1)
        t2 = jnp.sum(x1 * x1)
        mean2 = t1 * inv_n
        var2 = t2 * inv_n - mean2 * mean2
        x2n = (x1 - mean2) * lax.rsqrt(var2 + eps)               # (C, HW), no affine here

        # ---- MLP: fc1 -> StarReLU -> fc2 (bf16 MXU inputs, f32 accumulation) ----
        h = jnp.dot(w1t, x2n.astype(jnp.bfloat16),
                    preferred_element_type=jnp.float32) + bf1f   # (Hd, HW)
        r = jnp.maximum(h, 0.0)
        rr = r * r                                               # StarReLU scale/bias folded into fc2
        y = jnp.dot(w2t, rr.astype(jnp.bfloat16),
                    preferred_element_type=jnp.float32) + bf2f   # (C, HW) = ls2 * mlp(norm2(x1))

        # ---- residual 2, lane-dense store (last dim = HW) ----
        o_ref[b] = (x1 + y).astype(o_ref.dtype)


def poolformer_block(x_nchw, params):
    """x_nchw: (B, C, H, W) float32, PyTorch layout."""
    B, C, H, W = x_nchw.shape
    HW = H * W
    Hd = params["w1"].shape[1]
    assert C % 8 == 0 and HW % 128 == 0, "need C % 8 == 0 and H*W % 128 == 0"

    f32 = jnp.float32
    # NCHW is already channels-major per image: (B, C, H*W) is a free, contiguous reshape.
    x2d = x_nchw.reshape(B, C, HW).astype(f32)

    # ---- fold affine / layer-scale / StarReLU constants into the weights (wrapper-side glue) ----
    g1, b1 = params["g1"].astype(f32), params["b1"].astype(f32)
    g2, b2 = params["g2"].astype(f32), params["b2"].astype(f32)
    ls1, ls2 = params["ls1"].astype(f32), params["ls2"].astype(f32)
    w1, bf1 = params["w1"].astype(f32), params["bf1"].astype(f32)     # (C, Hd), (Hd,)
    w2, bf2 = params["w2"].astype(f32), params["bf2"].astype(f32)     # (Hd, C), (C,)
    srs = jnp.asarray(params["sr_scale"], f32)
    srb = jnp.asarray(params["sr_bias"], f32)

    g1f = (g1 * ls1).reshape(C, 1)
    b1f = (b1 * ls1).reshape(C, 1)
    w1t = jnp.transpose(g2[:, None] * w1).astype(jnp.bfloat16)        # (Hd, C)
    bf1f = (bf1 + b2 @ w1).reshape(Hd, 1)
    w2t = jnp.transpose(srs * w2 * ls2[None, :]).astype(jnp.bfloat16) # (C, Hd)
    bf2f = (ls2 * (srb * jnp.sum(w2, axis=0) + bf2)).reshape(C, 1)

    # ---- images per grid step: amortize ~0.35us/step, stay inside v7x's 64 MiB physical VMEM ----
    # rough f32 live bytes per image: double-buffered in/out blocks + (C + Hd)-wide intermediates
    per_img_bytes = (4 * C * HW + 2 * (C + Hd) * HW) * 4
    cap = max(1, (40 << 20) // per_img_bytes)      # ~40 MiB budget (v7x-safe; raise vmem_limit_bytes
    Bt = 1                                         #  on v5e/v6e if a much larger Bt is wanted)
    for cand in range(1, B + 1):
        if B % cand == 0 and cand <= cap and (B // cand) >= min(2, B):
            Bt = cand                              # largest divisor that keeps grid >= 2 (megacore)

    operands = (x2d, g1f, b1f, w1t, bf1f, w2t, bf2f)

    def full_spec(a):
        return pl.BlockSpec(a.shape, lambda i, _nd=a.ndim: (0,) * _nd)

    in_specs = [pl.BlockSpec((Bt, C, HW), lambda i: (i, 0, 0))]
    in_specs += [full_spec(a) for a in operands[1:]]

    out = pl.pallas_call(
        functools.partial(poolformer_block_kernel, H=H, W=W),
        out_shape=jax.ShapeDtypeStruct((B, C, HW), f32),
        grid=(B // Bt,),
        in_specs=in_specs,
        out_specs=pl.BlockSpec((Bt, C, HW), lambda i: (i, 0, 0)),
        compiler_params=pltpu.CompilerParams(dimension_semantics=("parallel",)),
    )(*operands)
    return out.reshape(B, C, H, W)


def poolformer_block_ref(x, params):
    """Pure-JAX reference, NCHW, matching PyTorch semantics (unfolded weights)."""
    eps = 1e-5

    def gn(v, g, b):  # GroupNorm(1, dim)
        mean = jnp.mean(v, axis=(1, 2, 3), keepdims=True)
        var = jnp.mean(jnp.square(v - mean), axis=(1, 2, 3), keepdims=True)
        return (v - mean) * lax.rsqrt(var + eps) * g[None, :, None, None] + b[None, :, None, None]

    def avgpool(v):  # AvgPool2d(3, 1, 1, count_include_pad=False)
        pad = ((0, 0), (0, 0), (1, 1), (1, 1))
        s = lax.reduce_window(v, 0.0, lax.add, (1, 1, 3, 3), (1, 1, 1, 1), pad)
        c = lax.reduce_window(jnp.ones_like(v), 0.0, lax.add, (1, 1, 3, 3), (1, 1, 1, 1), pad)
        return s / c

    xn = gn(x, params["g1"], params["b1"])
    x1 = x + params["ls1"][None, :, None, None] * (avgpool(xn) - xn)
    x2 = gn(x1, params["g2"], params["b2"])
    h = jnp.einsum("bchw,cd->bdhw", x2, params["w1"]) + params["bf1"][None, :, None, None]
    r = jnp.maximum(h, 0.0)
    h = params["sr_scale"] * r * r + params["sr_bias"]
    y = jnp.einsum("bdhw,dc->bchw", h, params["w2"]) + params["bf2"][None, :, None, None]
    return x1 + params["ls2"][None, :, None, None] * y


if __name__ == "__main__":
    key = jax.random.PRNGKey(0)
    B, C, H, W = 4, 32, 16, 16          # dim=32 -> hidden_dim=128; B=4 so Bt=2, grid=2
    Hd = 4 * C
    ks = jax.random.split(key, 11)

    x = jax.random.normal(ks[0], (B, C, H, W), jnp.float32)

    # non-trivial affine / scale params so all the weight-folding paths are actually exercised
    params = dict(
        g1=1.0 + 0.1 * jax.random.normal(ks[1], (C,), jnp.float32),
        b1=0.1 * jax.random.normal(ks[2], (C,), jnp.float32),
        g2=1.0 + 0.1 * jax.random.normal(ks[3], (C,), jnp.float32),
        b2=0.1 * jax.random.normal(ks[4], (C,), jnp.float32),
        ls1=0.5 + 0.2 * jax.random.uniform(ks[5], (C,), jnp.float32),
        ls2=0.5 + 0.2 * jax.random.uniform(ks[6], (C,), jnp.float32),
        w1=0.05 * jax.random.normal(ks[7], (C, Hd), jnp.float32),
        bf1=0.02 * jax.random.normal(ks[8], (Hd,), jnp.float32),
        w2=0.05 * jax.random.normal(ks[9], (Hd, C), jnp.float32),
        bf2=0.02 * jax.random.normal(ks[10], (C,), jnp.float32),
        sr_scale=0.9,
        sr_bias=0.05,
    )

    out = jax.block_until_ready(poolformer_block(x, params))
    ref = poolformer_block_ref(x, params)

    assert out.shape == x.shape and out.dtype == x.dtype
    max_err = float(jnp.max(jnp.abs(out - ref)))
    assert max_err < 1e-2, f"max abs error {max_err}"   # bf16 MXU inputs -> relaxed tolerance
    print("KERNEL_OK")
</pallas_src>

<mosaic_0001>
module attributes {stable_mosaic.version = 11 : i64} {
  func.func @poolformer_block_kernel(%arg0: i32, %arg1: memref<2x32x256xf32, #tpu.memory_space<vmem>>, %arg2: memref<32x1xf32, #tpu.memory_space<vmem>>, %arg3: memref<32x1xf32, #tpu.memory_space<vmem>>, %arg4: memref<128x32xbf16, #tpu.memory_space<vmem>>, %arg5: memref<128x1xf32, #tpu.memory_space<vmem>>, %arg6: memref<32x128xbf16, #tpu.memory_space<vmem>>, %arg7: memref<32x1xf32, #tpu.memory_space<vmem>>, %arg8: memref<2x32x256xf32, #tpu.memory_space<vmem>>) attributes {dimension_semantics = [#tpu.dimension_semantics<parallel>], iteration_bounds = array<i64: 2>, scalar_prefetch = 0 : i64, scratch_operands = 0 : i64, tpu.core_type = #tpu.core_type<tc>, window_params = [{transform_indices = @transform_0, window_bounds = array<i64: 2, 32, 256>}, {pipeline_mode = #tpu.pipeline_mode<synchronous>, transform_indices = @transform_1, window_bounds = array<i64: 32, 1>}, {pipeline_mode = #tpu.pipeline_mode<synchronous>, transform_indices = @transform_2, window_bounds = array<i64: 32, 1>}, {pipeline_mode = #tpu.pipeline_mode<synchronous>, transform_indices = @transform_3, window_bounds = array<i64: 128, 32>}, {pipeline_mode = #tpu.pipeline_mode<synchronous>, transform_indices = @transform_4, window_bounds = array<i64: 128, 1>}, {pipeline_mode = #tpu.pipeline_mode<synchronous>, transform_indices = @transform_5, window_bounds = array<i64: 32, 128>}, {pipeline_mode = #tpu.pipeline_mode<synchronous>, transform_indices = @transform_6, window_bounds = array<i64: 32, 1>}, {transform_indices = @transform_7, window_bounds = array<i64: 2, 32, 256>}]} {
    %0 = tpu.iota {dimensions = array<i32: 1>} : vector<1x256xi32>
    %c16_i32 = arith.constant 16 : i32
    %c0_i32 = arith.constant 0 : i32
    %1 = arith.cmpi eq, %c16_i32, %c0_i32 : i32
    %c1_i32 = arith.constant 1 : i32
    %2 = arith.select %1, %c1_i32, %c16_i32 : i32
    %3 = vector.broadcast %2 : i32 to vector<1x256xi32>
    %4 = arith.remsi %0, %3 : vector<1x256xi32>
    %c0_i32_0 = arith.constant 0 : i32
    %5 = vector.broadcast %c0_i32_0 : i32 to vector<1x256xi32>
    %6 = arith.cmpi ne, %4, %5 : vector<1x256xi32>
    %c0_i32_1 = arith.constant 0 : i32
    %7 = vector.broadcast %c0_i32_1 : i32 to vector<1x256xi32>
    %8 = arith.cmpi slt, %4, %7 : vector<1x256xi32>
    %c0_i32_2 = arith.constant 0 : i32
    %9 = arith.cmpi slt, %2, %c0_i32_2 : i32
    %10 = vector.broadcast %9 : i1 to vector<1x256xi1>
    %11 = vector.broadcast %10 : vector<1x256xi1> to vector<1x256xi1>
    %12 = arith.xori %8, %11 : vector<1x256xi1>
    %13 = arith.andi %12, %6 : vector<1x256xi1>
    %14 = vector.broadcast %2 : i32 to vector<1x256xi32>
    %15 = arith.addi %4, %14 : vector<1x256xi32>
    %16 = arith.select %13, %15, %4 : vector<1x256xi1>, vector<1x256xi32>
    %c0_i32_3 = arith.constant 0 : i32
    %17 = vector.broadcast %c0_i32_3 : i32 to vector<1x256xi32>
    %18 = arith.cmpi sgt, %16, %17 : vector<1x256xi32>
    %cst = arith.constant 1.000000e+00 : f32
    %cst_4 = arith.constant 0.000000e+00 : f32
    %19 = vector.broadcast %cst : f32 to vector<1x256xf32>
    %20 = vector.broadcast %cst_4 : f32 to vector<1x256xf32>
    %21 = arith.select %18, %19, %20 : vector<1x256xi1>, vector<1x256xf32>
    %c15_i32 = arith.constant 15 : i32
    %22 = vector.broadcast %c15_i32 : i32 to vector<1x256xi32>
    %23 = arith.cmpi slt, %16, %22 : vector<1x256xi32>
    %cst_5 = arith.constant 1.000000e+00 : f32
    %cst_6 = arith.constant 0.000000e+00 : f32
    %24 = vector.broadcast %cst_5 : f32 to vector<1x256xf32>
    %25 = vector.broadcast %cst_6 : f32 to vector<1x256xf32>
    %26 = arith.select %23, %24, %25 : vector<1x256xi1>, vector<1x256xf32>
    %c16_i32_7 = arith.constant 16 : i32
    %27 = vector.broadcast %c16_i32_7 : i32 to vector<1x256xi32>
    %28 = arith.cmpi sge, %0, %27 : vector<1x256xi32>
    %cst_8 = arith.constant 1.000000e+00 : f32
    %cst_9 = arith.constant 0.000000e+00 : f32
    %29 = vector.broadcast %cst_8 : f32 to vector<1x256xf32>
    %30 = vector.broadcast %cst_9 : f32 to vector<1x256xf32>
    %31 = arith.select %28, %29, %30 : vector<1x256xi1>, vector<1x256xf32>
    %c240_i32 = arith.constant 240 : i32
    %32 = vector.broadcast %c240_i32 : i32 to vector<1x256xi32>
    %33 = arith.cmpi slt, %0, %32 : vector<1x256xi32>
    %cst_10 = arith.constant 1.000000e+00 : f32
    %cst_11 = arith.constant 0.000000e+00 : f32
    %34 = vector.broadcast %cst_10 : f32 to vector<1x256xf32>
    %35 = vector.broadcast %cst_11 : f32 to vector<1x256xf32>
    %36 = arith.select %33, %34, %35 : vector<1x256xi1>, vector<1x256xf32>
    %cst_12 = arith.constant 1.000000e+00 : f32
    %37 = vector.broadcast %cst_12 : f32 to vector<1x256xf32>
    %38 = arith.addf %37, %21 : vector<1x256xf32>
    %39 = arith.addf %38, %26 : vector<1x256xf32>
    %cst_13 = arith.constant 1.000000e+00 : f32
    %40 = vector.broadcast %cst_13 : f32 to vector<1x256xf32>
    %41 = arith.addf %40, %31 : vector<1x256xf32>
    %42 = arith.addf %41, %36 : vector<1x256xf32>
    %43 = arith.mulf %39, %42 : vector<1x256xf32>
    %cst_14 = arith.constant 1.000000e+00 : f32
    %44 = vector.broadcast %cst_14 : f32 to vector<1x256xf32>
    %45 = arith.divf %44, %43 : vector<1x256xf32>
    %c0 = arith.constant 0 : index
    %c0_15 = arith.constant 0 : index
    %46 = vector.load %arg2[%c0, %c0_15] : memref<32x1xf32, #tpu.memory_space<vmem>>, vector<32x1xf32>
    %c0_16 = arith.constant 0 : index
    %c0_17 = arith.constant 0 : index
    %47 = vector.load %arg3[%c0_16, %c0_17] : memref<32x1xf32, #tpu.memory_space<vmem>>, vector<32x1xf32>
    %c0_18 = arith.constant 0 : index
    %c0_19 = arith.constant 0 : index
    %48 = vector.load %arg5[%c0_18, %c0_19] : memref<128x1xf32, #tpu.memory_space<vmem>>, vector<128x1xf32>
    %c0_20 = arith.constant 0 : index
    %c0_21 = arith.constant 0 : index
    %49 = vector.load %arg7[%c0_20, %c0_21] : memref<32x1xf32, #tpu.memory_space<vmem>>, vector<32x1xf32>
    %c0_22 = arith.constant 0 : index
    %c0_23 = arith.constant 0 : index
    %50 = vector.load %arg4[%c0_22, %c0_23] : memref<128x32xbf16, #tpu.memory_space<vmem>>, vector<128x32xbf16>
    %c0_24 = arith.constant 0 : index
    %c0_25 = arith.constant 0 : index
    %51 = vector.load %arg6[%c0_24, %c0_25] : memref<32x128xbf16, #tpu.memory_space<vmem>>, vector<32x128xbf16>
    %c0_26 = arith.constant 0 : index
    %c0_27 = arith.constant 0 : index
    %c0_28 = arith.constant 0 : index
    %52 = vector.load %arg1[%c0_26, %c0_27, %c0_28] : memref<2x32x256xf32, #tpu.memory_space<vmem>>, vector<1x32x256xf32>
    %53 = vector.shape_cast %52 : vector<1x32x256xf32> to vector<32x256xf32>
    %54 = vector.shape_cast %53 : vector<32x256xf32> to vector<1x32x256xf32>
    %cst_29 = arith.constant dense<0.000000e+00> : vector<1xf32>
    %55 = vector.multi_reduction <add>, %54, %cst_29 [1, 2] : vector<1x32x256xf32> to vector<1xf32>
    %56 = vector.shape_cast %55 : vector<1xf32> to vector<1x1x1xf32>
    %57 = vector.extract %56[0, 0, 0] : f32 from vector<1x1x1xf32>
    %58 = arith.mulf %53, %53 : vector<32x256xf32>
    %59 = vector.shape_cast %58 : vector<32x256xf32> to vector<1x32x256xf32>
    %cst_30 = arith.constant dense<0.000000e+00> : vector<1xf32>
    %60 = vector.multi_reduction <add>, %59, %cst_30 [1, 2] : vector<1x32x256xf32> to vector<1xf32>
    %61 = vector.shape_cast %60 : vector<1xf32> to vector<1x1x1xf32>
    %62 = vector.extract %61[0, 0, 0] : f32 from vector<1x1x1xf32>
    %cst_31 = arith.constant 1.22070313E-4 : f32
    %63 = arith.mulf %57, %cst_31 : f32
    %cst_32 = arith.constant 1.22070313E-4 : f32
    %64 = arith.mulf %62, %cst_32 : f32
    %65 = arith.mulf %63, %63 : f32
    %66 = arith.subf %64, %65 : f32
    %67 = vector.broadcast %63 : f32 to vector<32x256xf32>
    %68 = arith.subf %53, %67 : vector<32x256xf32>
    %cst_33 = arith.constant 9.99999974E-6 : f32
    %69 = arith.addf %66, %cst_33 : f32
    %70 = math.rsqrt %69 : f32
    %71 = vector.broadcast %70 : f32 to vector<32x256xf32>
    %72 = arith.mulf %68, %71 : vector<32x256xf32>
    %73 = vector.broadcast %46 : vector<32x1xf32> to vector<32x256xf32>
    %74 = arith.mulf %72, %73 : vector<32x256xf32>
    %75 = vector.broadcast %47 : vector<32x1xf32> to vector<32x256xf32>
    %76 = arith.addf %74, %75 : vector<32x256xf32>
    %c1_i32_34 = arith.constant 1 : i32
    %77 = tpu.dynamic_rotate %76 by %c1_i32_34 dim 1 : vector<32x256xf32>, i32 -> vector<32x256xf32>
    %78 = vector.broadcast %21 : vector<1x256xf32> to vector<32x256xf32>
    %79 = arith.mulf %78, %77 : vector<32x256xf32>
    %80 = arith.addf %76, %79 : vector<32x256xf32>
    %c255_i32 = arith.constant 255 : i32
    %81 = tpu.dynamic_rotate %76 by %c255_i32 dim 1 : vector<32x256xf32>, i32 -> vector<32x256xf32>
    %82 = vector.broadcast %26 : vector<1x256xf32> to vector<32x256xf32>
    %83 = arith.mulf %82, %81 : vector<32x256xf32>
    %84 = arith.addf %80, %83 : vector<32x256xf32>
    %c16_i32_35 = arith.constant 16 : i32
    %85 = tpu.dynamic_rotate %84 by %c16_i32_35 dim 1 : vector<32x256xf32>, i32 -> vector<32x256xf32>
    %86 = vector.broadcast %31 : vector<1x256xf32> to vector<32x256xf32>
    %87 = arith.mulf %86, %85 : vector<32x256xf32>
    %88 = arith.addf %84, %87 : vector<32x256xf32>
    %c240_i32_36 = arith.constant 240 : i32
    %89 = tpu.dynamic_rotate %84 by %c240_i32_36 dim 1 : vector<32x256xf32>, i32 -> vector<32x256xf32>
    %90 = vector.broadcast %36 : vector<1x256xf32> to vector<32x256xf32>
    %91 = arith.mulf %90, %89 : vector<32x256xf32>
    %92 = arith.addf %88, %91 : vector<32x256xf32>
    %93 = vector.broadcast %45 : vector<1x256xf32> to vector<32x256xf32>
    %94 = arith.mulf %92, %93 : vector<32x256xf32>
    %95 = arith.addf %53, %94 : vector<32x256xf32>
    %96 = arith.subf %95, %76 : vector<32x256xf32>
    %97 = vector.shape_cast %96 : vector<32x256xf32> to vector<1x32x256xf32>
    %cst_37 = arith.constant dense<0.000000e+00> : vector<1xf32>
    %98 = vector.multi_reduction <add>, %97, %cst_37 [1, 2] : vector<1x32x256xf32> to vector<1xf32>
    %99 = vector.shape_cast %98 : vector<1xf32> to vector<1x1x1xf32>
    %100 = vector.extract %99[0, 0, 0] : f32 from vector<1x1x1xf32>
    %101 = arith.mulf %96, %96 : vector<32x256xf32>
    %102 = vector.shape_cast %101 : vector<32x256xf32> to vector<1x32x256xf32>
    %cst_38 = arith.constant dense<0.000000e+00> : vector<1xf32>
    %103 = vector.multi_reduction <add>, %102, %cst_38 [1, 2] : vector<1x32x256xf32> to vector<1xf32>
    %104 = vector.shape_cast %103 : vector<1xf32> to vector<1x1x1xf32>
    %105 = vector.extract %104[0, 0, 0] : f32 from vector<1x1x1xf32>
    %cst_39 = arith.constant 1.22070313E-4 : f32
    %106 = arith.mulf %100, %cst_39 : f32
    %cst_40 = arith.constant 1.22070313E-4 : f32
    %107 = arith.mulf %105, %cst_40 : f32
    %108 = arith.mulf %106, %106 : f32
    %109 = arith.subf %107, %108 : f32
    %110 = vector.broadcast %106 : f32 to vector<32x256xf32>
    %111 = arith.subf %96, %110 : vector<32x256xf32>
    %cst_41 = arith.constant 9.99999974E-6 : f32
    %112 = arith.addf %109, %cst_41 : f32
    %113 = math.rsqrt %112 : f32
    %114 = vector.broadcast %113 : f32 to vector<32x256xf32>
    %115 = arith.mulf %111, %114 : vector<32x256xf32>
    %116 = arith.truncf %115 : vector<32x256xf32> to vector<32x256xbf16>
    %cst_42 = arith.constant dense<0.000000e+00> : vector<128x256xf32>
    %117 = tpu.matmul %50, %116, %cst_42 {dimension_numbers = #tpu.dot_dimension_numbers<[1], [0], [0], [1], [0, 0, 1, 1], [], []>} : vector<128x32xbf16>, vector<32x256xbf16>, vector<128x256xf32> -> vector<128x256xf32>
    %118 = vector.broadcast %48 : vector<128x1xf32> to vector<128x256xf32>
    %119 = arith.addf %117, %118 : vector<128x256xf32>
    %cst_43 = arith.constant 0.000000e+00 : f32
    %120 = vector.broadcast %cst_43 : f32 to vector<128x256xf32>
    %121 = arith.maximumf %119, %120 : vector<128x256xf32>
    %122 = arith.mulf %121, %121 : vector<128x256xf32>
    %123 = arith.truncf %122 : vector<128x256xf32> to vector<128x256xbf16>
    %cst_44 = arith.constant dense<0.000000e+00> : vector<32x256xf32>
    %124 = tpu.matmul %51, %123, %cst_44 {dimension_numbers = #tpu.dot_dimension_numbers<[1], [0], [0], [1], [0, 0, 1, 1], [], []>} : vector<32x128xbf16>, vector<128x256xbf16>, vector<32x256xf32> -> vector<32x256xf32>
    %125 = vector.broadcast %49 : vector<32x1xf32> to vector<32x256xf32>
    %126 = arith.addf %124, %125 : vector<32x256xf32>
    %127 = arith.addf %96, %126 : vector<32x256xf32>
    %c0_45 = arith.constant 0 : index
    %c0_46 = arith.constant 0 : index
    %c0_47 = arith.constant 0 : index
    %128 = vector.load %arg8[%c0_45, %c0_46, %c0_47] : memref<2x32x256xf32, #tpu.memory_space<vmem>>, vector<1x32x256xf32>
    %129 = vector.shape_cast %128 : vector<1x32x256xf32> to vector<32x256xf32>
    %130 = vector.shape_cast %127 : vector<32x256xf32> to vector<1x32x256xf32>
    tpu.vector_store %arg8[%c0_45, %c0_46, %c0_47], %130 {strides = array<i32>} : memref<2x32x256xf32, #tpu.memory_space<vmem>>, vector<1x32x256xf32>,
    %c1 = arith.constant 1 : index
    %c0_48 = arith.constant 0 : index
    %c0_49 = arith.constant 0 : index
    %131 = vector.load %arg1[%c1, %c0_48, %c0_49] : memref<2x32x256xf32, #tpu.memory_space<vmem>>, vector<1x32x256xf32>
    %132 = vector.shape_cast %131 : vector<1x32x256xf32> to vector<32x256xf32>
    %133 = vector.shape_cast %132 : vector<32x256xf32> to vector<1x32x256xf32>
    %cst_50 = arith.constant dense<0.000000e+00> : vector<1xf32>
    %134 = vector.multi_reduction <add>, %133, %cst_50 [1, 2] : vector<1x32x256xf32> to vector<1xf32>
    %135 = vector.shape_cast %134 : vector<1xf32> to vector<1x1x1xf32>
    %136 = vector.extract %135[0, 0, 0] : f32 from vector<1x1x1xf32>
    %137 = arith.mulf %132, %132 : vector<32x256xf32>
    %138 = vector.shape_cast %137 : vector<32x256xf32> to vector<1x32x256xf32>
    %cst_51 = arith.constant dense<0.000000e+00> : vector<1xf32>
    %139 = vector.multi_reduction <add>, %138, %cst_51 [1, 2] : vector<1x32x256xf32> to vector<1xf32>
    %140 = vector.shape_cast %139 : vector<1xf32> to vector<1x1x1xf32>
    %141 = vector.extract %140[0, 0, 0] : f32 from vector<1x1x1xf32>
    %cst_52 = arith.constant 1.22070313E-4 : f32
    %142 = arith.mulf %136, %cst_52 : f32
    %cst_53 = arith.constant 1.22070313E-4 : f32
    %143 = arith.mulf %141, %cst_53 : f32
    %144 = arith.mulf %142, %142 : f32
    %145 = arith.subf %143, %144 : f32
    %146 = vector.broadcast %142 : f32 to vector<32x256xf32>
    %147 = arith.subf %132, %146 : vector<32x256xf32>
    %cst_54 = arith.constant 9.99999974E-6 : f32
    %148 = arith.addf %145, %cst_54 : f32
    %149 = math.rsqrt %148 : f32
    %150 = vector.broadcast %149 : f32 to vector<32x256xf32>
    %151 = arith.mulf %147, %150 : vector<32x256xf32>
    %152 = vector.broadcast %46 : vector<32x1xf32> to vector<32x256xf32>
    %153 = arith.mulf %151, %152 : vector<32x256xf32>
    %154 = vector.broadcast %47 : vector<32x1xf32> to vector<32x256xf32>
    %155 = arith.addf %153, %154 : vector<32x256xf32>
    %c1_i32_55 = arith.constant 1 : i32
    %156 = tpu.dynamic_rotate %155 by %c1_i32_55 dim 1 : vector<32x256xf32>, i32 -> vector<32x256xf32>
    %157 = vector.broadcast %21 : vector<1x256xf32> to vector<32x256xf32>
    %158 = arith.mulf %157, %156 : vector<32x256xf32>
    %159 = arith.addf %155, %158 : vector<32x256xf32>
    %c255_i32_56 = arith.constant 255 : i32
    %160 = tpu.dynamic_rotate %155 by %c255_i32_56 dim 1 : vector<32x256xf32>, i32 -> vector<32x256xf32>
    %161 = vector.broadcast %26 : vector<1x256xf32> to vector<32x256xf32>
    %162 = arith.mulf %161, %160 : vector<32x256xf32>
    %163 = arith.addf %159, %162 : vector<32x256xf32>
    %c16_i32_57 = arith.constant 16 : i32
    %164 = tpu.dynamic_rotate %163 by %c16_i32_57 dim 1 : vector<32x256xf32>, i32 -> vector<32x256xf32>
    %165 = vector.broadcast %31 : vector<1x256xf32> to vector<32x256xf32>
    %166 = arith.mulf %165, %164 : vector<32x256xf32>
    %167 = arith.addf %163, %166 : vector<32x256xf32>
    %c240_i32_58 = arith.constant 240 : i32
    %168 = tpu.dynamic_rotate %163 by %c240_i32_58 dim 1 : vector<32x256xf32>, i32 -> vector<32x256xf32>
    %169 = vector.broadcast %36 : vector<1x256xf32> to vector<32x256xf32>
    %170 = arith.mulf %169, %168 : vector<32x256xf32>
    %171 = arith.addf %167, %170 : vector<32x256xf32>
    %172 = vector.broadcast %45 : vector<1x256xf32> to vector<32x256xf32>
    %173 = arith.mulf %171, %172 : vector<32x256xf32>
    %174 = arith.addf %132, %173 : vector<32x256xf32>
    %175 = arith.subf %174, %155 : vector<32x256xf32>
    %176 = vector.shape_cast %175 : vector<32x256xf32> to vector<1x32x256xf32>
    %cst_59 = arith.constant dense<0.000000e+00> : vector<1xf32>
    %177 = vector.multi_reduction <add>, %176, %cst_59 [1, 2] : vector<1x32x256xf32> to vector<1xf32>
    %178 = vector.shape_cast %177 : vector<1xf32> to vector<1x1x1xf32>
    %179 = vector.extract %178[0, 0, 0] : f32 from vector<1x1x1xf32>
    %180 = arith.mulf %175, %175 : vector<32x256xf32>
    %181 = vector.shape_cast %180 : vector<32x256xf32> to vector<1x32x256xf32>
    %cst_60 = arith.constant dense<0.000000e+00> : vector<1xf32>
    %182 = vector.multi_reduction <add>, %181, %cst_60 [1, 2] : vector<1x32x256xf32> to vector<1xf32>
    %183 = vector.shape_cast %182 : vector<1xf32> to vector<1x1x1xf32>
    %184 = vector.extract %183[0, 0, 0] : f32 from vector<1x1x1xf32>
    %cst_61 = arith.constant 1.22070313E-4 : f32
    %185 = arith.mulf %179, %cst_61 : f32
    %cst_62 = arith.constant 1.22070313E-4 : f32
    %186 = arith.mulf %184, %cst_62 : f32
    %187 = arith.mulf %185, %185 : f32
    %188 = arith.subf %186, %187 : f32
    %189 = vector.broadcast %185 : f32 to vector<32x256xf32>
    %190 = arith.subf %175, %189 : vector<32x256xf32>
    %cst_63 = arith.constant 9.99999974E-6 : f32
    %191 = arith.addf %188, %cst_63 : f32
    %192 = math.rsqrt %191 : f32
    %193 = vector.broadcast %192 : f32 to vector<32x256xf32>
    %194 = arith.mulf %190, %193 : vector<32x256xf32>
    %195 = arith.truncf %194 : vector<32x256xf32> to vector<32x256xbf16>
    %cst_64 = arith.constant dense<0.000000e+00> : vector<128x256xf32>
    %196 = tpu.matmul %50, %195, %cst_64 {dimension_numbers = #tpu.dot_dimension_numbers<[1], [0], [0], [1], [0, 0, 1, 1], [], []>} : vector<128x32xbf16>, vector<32x256xbf16>, vector<128x256xf32> -> vector<128x256xf32>
    %197 = vector.broadcast %48 : vector<128x1xf32> to vector<128x256xf32>
    %198 = arith.addf %196, %197 : vector<128x256xf32>
    %cst_65 = arith.constant 0.000000e+00 : f32
    %199 = vector.broadcast %cst_65 : f32 to vector<128x256xf32>
    %200 = arith.maximumf %198, %199 : vector<128x256xf32>
    %201 = arith.mulf %200, %200 : vector<128x256xf32>
    %202 = arith.truncf %201 : vector<128x256xf32> to vector<128x256xbf16>
    %cst_66 = arith.constant dense<0.000000e+00> : vector<32x256xf32>
    %203 = tpu.matmul %51, %202, %cst_66 {dimension_numbers = #tpu.dot_dimension_numbers<[1], [0], [0], [1], [0, 0, 1, 1], [], []>} : vector<32x128xbf16>, vector<128x256xbf16>, vector<32x256xf32> -> vector<32x256xf32>
    %204 = vector.broadcast %49 : vector<32x1xf32> to vector<32x256xf32>
    %205 = arith.addf %203, %204 : vector<32x256xf32>
    %206 = arith.addf %175, %205 : vector<32x256xf32>
    %c1_67 = arith.constant 1 : index
    %c0_68 = arith.constant 0 : index
    %c0_69 = arith.constant 0 : index
    %207 = vector.load %arg8[%c1_67, %c0_68, %c0_69] : memref<2x32x256xf32, #tpu.memory_space<vmem>>, vector<1x32x256xf32>
    %208 = vector.shape_cast %207 : vector<1x32x256xf32> to vector<32x256xf32>
    %209 = vector.shape_cast %206 : vector<32x256xf32> to vector<1x32x256xf32>
    tpu.vector_store %arg8[%c1_67, %c0_68, %c0_69], %209 {strides = array<i32>} : memref<2x32x256xf32, #tpu.memory_space<vmem>>, vector<1x32x256xf32>,
    return
  }
  func.func @transform_0(%arg0: i32) -> (i32, i32, i32) {
    %c0_i32 = arith.constant 0 : i32
    %c0_i32_0 = arith.constant 0 : i32
    %c0_i32_1 = arith.constant 0 : i32
    return %arg0, %c0_i32, %c0_i32_0 : i32, i32, i32
  }
  func.func @transform_1(%arg0: i32) -> (i32, i32) {
    %c0_i32 = arith.constant 0 : i32
    %c0_i32_0 = arith.constant 0 : i32
    %c0_i32_1 = arith.constant 0 : i32
    return %c0_i32, %c0_i32_0 : i32, i32
  }
  func.func @transform_2(%arg0: i32) -> (i32, i32) {
    %c0_i32 = arith.constant 0 : i32
    %c0_i32_0 = arith.constant 0 : i32
    %c0_i32_1 = arith.constant 0 : i32
    return %c0_i32, %c0_i32_0 : i32, i32
  }
  func.func @transform_3(%arg0: i32) -> (i32, i32) {
    %c0_i32 = arith.constant 0 : i32
    %c0_i32_0 = arith.constant 0 : i32
    %c0_i32_1 = arith.constant 0 : i32
    return %c0_i32, %c0_i32_0 : i32, i32
  }
  func.func @transform_4(%arg0: i32) -> (i32, i32) {
    %c0_i32 = arith.constant 0 : i32
    %c0_i32_0 = arith.constant 0 : i32
    %c0_i32_1 = arith.constant 0 : i32
    return %c0_i32, %c0_i32_0 : i32, i32
  }
  func.func @transform_5(%arg0: i32) -> (i32, i32) {
    %c0_i32 = arith.constant 0 : i32
    %c0_i32_0 = arith.constant 0 : i32
    %c0_i32_1 = arith.constant 0 : i32
    return %c0_i32, %c0_i32_0 : i32, i32
  }
  func.func @transform_6(%arg0: i32) -> (i32, i32) {
    %c0_i32 = arith.constant 0 : i32
    %c0_i32_0 = arith.constant 0 : i32
    %c0_i32_1 = arith.constant 0 : i32
    return %c0_i32, %c0_i32_0 : i32, i32
  }
  func.func @transform_7(%arg0: i32) -> (i32, i32, i32) {
    %c0_i32 = arith.constant 0 : i32
    %c0_i32_0 = arith.constant 0 : i32
    %c0_i32_1 = arith.constant 0 : i32
    return %arg0, %c0_i32, %c0_i32_0 : i32, i32, i32
  }
}

</mosaic_0001>

<llo_original>
// kernel: tpu_custom_call.1
$region0: #{tpu_custom_call.1}
  #allocation0 [shape = 'u32[]', space=smem, size = 0x4, offset = 0x4, fixed_abs, tag = 'smem constant byte address 0x4 - core index']
  #allocation1 [shape = 'u32[144,128]{1,0:T(1,128)}', space=vmem, size = 0x12000, scoped, tag = 'internal scratch']
  %s0 = inlined_call_operand.vmem [shape: f32[4,32,256], index: 0, kind: input, shape index: {}]
  %s1 = inlined_call_operand.vmem [shape: f32[32,1], index: 1, kind: input, shape index: {}]
  %s2 = inlined_call_operand.vmem [shape: f32[32,1], index: 2, kind: input, shape index: {}]
  %s3 = inlined_call_operand.vmem [shape: bf16[128,32], index: 3, kind: input, shape index: {}]
  %s4 = inlined_call_operand.vmem [shape: f32[128,1], index: 4, kind: input, shape index: {}]
  %s5 = inlined_call_operand.vmem [shape: bf16[32,128], index: 5, kind: input, shape index: {}]
  %s6 = inlined_call_operand.vmem [shape: f32[32,1], index: 6, kind: input, shape index: {}]
  %s7 = inlined_call_operand.hbm [shape: f32[4,32,256], index: 7, kind: output, shape index: {}]
  %s8 = sld [smem:[#allocation0]]
  $region61: #{tpu_custom_call.1} parent=0
    _
  %s10 = ssub.s32 1, %s8
  %s11 = scalar_select 0, %s10, %s8
  $region1: #{tpu_custom_call.1} parent=0
    #allocation2 [shape = 'u8[131072]{0}', space=vmem, size = 0x20000, scoped, tag = 'output window, operand 0']
    #allocation3 [shape = 's32[2]{0}', space=sflag, size = 0x8, scoped, tag = 'scoped memory for tpu_custom_call.1']
    %12 = vsyncpa [#allocation3], 0
    %s13 = scalar_lea.sflag [#allocation3], 1
    %14 = vsyncpa %s13, 0
    loop: start=0, step=1, limit=4
    $region2: #{tpu_custom_call.1} parent=1 // loop_pre_header
      _
    $region3: #{tpu_custom_call.1} parent=1 // loop_header
      %s16 = sphi 0, %s20
      %p17 = scmp.ge.s32.totalorder %s16, 4
      %s26 = sphi 0, %s28
      %s29 = sphi 0, %s26
      %s30 = sphi 0, %s29
      %s46 = sphi 0, %s30
      %s50 = sphi 0, %s50
      %s52 = sphi 0, %s50
      %s53 = sphi 0, %s52
      %s67 = sphi 0, %s53
      %s71 = sphi 0, %s71
      %s73 = sphi 0, %s71
      %s74 = sphi 0, %s73
      %s88 = sphi 0, %s74
      %s92 = sphi 0, %s92
      %s94 = sphi 0, %s92
      %s95 = sphi 0, %s94
      %s109 = sphi 0, %s95
      %s113 = sphi 0, %s113
      %s115 = sphi 0, %s113
      %s116 = sphi 0, %s115
      %s130 = sphi 0, %s116
      %s134 = sphi 0, %s134
      %s136 = sphi 0, %s134
      %s137 = sphi 0, %s136
      %s151 = sphi 0, %s137
      %s155 = sphi 0, %s155
      %s157 = sphi 0, %s155
      %s158 = sphi 0, %s157
      %s172 = sphi 0, %s158
      %s178 = sphi 0, %s180
      %s181 = sphi 0, %s178
      %s182 = sphi 0, %s181
      %s198 = sphi 0, %s182
    $region4: #{tpu_custom_call.1} parent=1 // loop_header_branch
      %19 = sbr.rel (%p17) target = $region8
    $region5: #{tpu_custom_call.1} parent=1 // loop_body
      %s21 = ssub.s32 %s16, 1
      %s22 = ssub.s32 %s16, 2
      %s23 = sadd.s32 %s16, 1
      %s24 = ssub.s32 %s16, %s23
      %p25 = scmp.eq.s32.totalorder %s24, 0
      %s27 = sadd.s32 %s26, 1
      %s28 = scalar_select %p25, %s26, %s27
      %p31 = pneg %p25
      %p32 = scmp.eq.s32.totalorder %s16, 1
      %p33 = por %p31, %p32
      %p34 = scmp.ne.s32.totalorder %s26, %s29
      %p35 = scmp.eq.s32.totalorder %s16, 0
      %p36 = por %p34, %p35
      %p37 = scmp.ne.s32.totalorder %s26, %s29
      %p38 = scmp.eq.s32.totalorder %s21, 1
      %p39 = por %p37, %p38
      %p40 = scmp.ne.s32.totalorder %s29, %s30
      %p41 = scmp.eq.s32.totalorder %s21, 0
      %p42 = por %p40, %p41
      %p43 = scmp.ne.s32.totalorder %s29, %s30
      %p44 = scmp.eq.s32.totalorder %s22, 1
      %p45 = por %p43, %p44
      %p47 = scmp.ne.s32.totalorder %s30, %s46
      %p48 = scmp.eq.s32.totalorder %s22, 0
      %p49 = por %p47, %p48
      %s51 = sadd.s32 %s50, 1
      %p54 = scmp.eq.s32.totalorder %s16, 1
      %p55 = scmp.ne.s32.totalorder %s50, %s52
      %p56 = scmp.eq.s32.totalorder %s16, 0
      %p57 = por %p55, %p56
      %p58 = scmp.ne.s32.totalorder %s50, %s52
      %p59 = scmp.eq.s32.totalorder %s21, 1
      %p60 = por %p58, %p59
      %p61 = scmp.ne.s32.totalorder %s52, %s53
      %p62 = scmp.eq.s32.totalorder %s21, 0
      %p63 = por %p61, %p62
      %p64 = scmp.ne.s32.totalorder %s52, %s53
      %p65 = scmp.eq.s32.totalorder %s22, 1
      %p66 = por %p64, %p65
      %p68 = scmp.ne.s32.totalorder %s53, %s67
      %p69 = scmp.eq.s32.totalorder %s22, 0
      %p70 = por %p68, %p69
      %s72 = sadd.s32 %s71, 1
      %p75 = scmp.eq.s32.totalorder %s16, 1
      %p76 = scmp.ne.s32.totalorder %s71, %s73
      %p77 = scmp.eq.s32.totalorder %s16, 0
      %p78 = por %p76, %p77
      %p79 = scmp.ne.s32.totalorder %s71, %s73
      %p80 = scmp.eq.s32.totalorder %s21, 1
      %p81 = por %p79, %p80
      %p82 = scmp.ne.s32.totalorder %s73, %s74
      %p83 = scmp.eq.s32.totalorder %s21, 0
      %p84 = por %p82, %p83
      %p85 = scmp.ne.s32.totalorder %s73, %s74
      %p86 = scmp.eq.s32.totalorder %s22, 1
      %p87 = por %p85, %p86
      %p89 = scmp.ne.s32.totalorder %s74, %s88
      %p90 = scmp.eq.s32.totalorder %s22, 0
      %p91 = por %p89, %p90
      %s93 = sadd.s32 %s92, 1
      %p96 = scmp.eq.s32.totalorder %s16, 1
      %p97 = scmp.ne.s32.totalorder %s92, %s94
      %p98 = scmp.eq.s32.totalorder %s16, 0
      %p99 = por %p97, %p98
      %p100 = scmp.ne.s32.totalorder %s92, %s94
      %p101 = scmp.eq.s32.totalorder %s21, 1
      %p102 = por %p100, %p101
      %p103 = scmp.ne.s32.totalorder %s94, %s95
      %p104 = scmp.eq.s32.totalorder %s21, 0
      %p105 = por %p103, %p104
      %p106 = scmp.ne.s32.totalorder %s94, %s95
      %p107 = scmp.eq.s32.totalorder %s22, 1
      %p108 = por %p106, %p107
      %p110 = scmp.ne.s32.totalorder %s95, %s109
      %p111 = scmp.eq.s32.totalorder %s22, 0
      %p112 = por %p110, %p111
      %s114 = sadd.s32 %s113, 1
      %p117 = scmp.eq.s32.totalorder %s16, 1
      %p118 = scmp.ne.s32.totalorder %s113, %s115
      %p119 = scmp.eq.s32.totalorder %s16, 0
      %p120 = por %p118, %p119
      %p121 = scmp.ne.s32.totalorder %s113, %s115
      %p122 = scmp.eq.s32.totalorder %s21, 1
      %p123 = por %p121, %p122
      %p124 = scmp.ne.s32.totalorder %s115, %s116
      %p125 = scmp.eq.s32.totalorder %s21, 0
      %p126 = por %p124, %p125
      %p127 = scmp.ne.s32.totalorder %s115, %s116
      %p128 = scmp.eq.s32.totalorder %s22, 1
      %p129 = por %p127, %p128
      %p131 = scmp.ne.s32.totalorder %s116, %s130
      %p132 = scmp.eq.s32.totalorder %s22, 0
      %p133 = por %p131, %p132
      %s135 = sadd.s32 %s134, 1
      %p138 = scmp.eq.s32.totalorder %s16, 1
      %p139 = scmp.ne.s32.totalorder %s134, %s136
      %p140 = scmp.eq.s32.totalorder %s16, 0
      %p141 = por %p139, %p140
      %p142 = scmp.ne.s32.totalorder %s134, %s136
      %p143 = scmp.eq.s32.totalorder %s21, 1
      %p144 = por %p142, %p143
      %p145 = scmp.ne.s32.totalorder %s136, %s137
      %p146 = scmp.eq.s32.totalorder %s21, 0
      %p147 = por %p145, %p146
      %p148 = scmp.ne.s32.totalorder %s136, %s137
      %p149 = scmp.eq.s32.totalorder %s22, 1
      %p150 = por %p148, %p149
      %p152 = scmp.ne.s32.totalorder %s137, %s151
      %p153 = scmp.eq.s32.totalorder %s22, 0
      %p154 = por %p152, %p153
      %s156 = sadd.s32 %s155, 1
      %p159 = scmp.eq.s32.totalorder %s16, 1
      %p160 = scmp.ne.s32.totalorder %s155, %s157
      %p161 = scmp.eq.s32.totalorder %s16, 0
      %p162 = por %p160, %p161
      %p163 = scmp.ne.s32.totalorder %s155, %s157
      %p164 = scmp.eq.s32.totalorder %s21, 1
      %p165 = por %p163, %p164
      %p166 = scmp.ne.s32.totalorder %s157, %s158
      %p167 = scmp.eq.s32.totalorder %s21, 0
      %p168 = por %p166, %p167
      %p169 = scmp.ne.s32.totalorder %s157, %s158
      %p170 = scmp.eq.s32.totalorder %s22, 1
      %p171 = por %p169, %p170
      %p173 = scmp.ne.s32.totalorder %s158, %s172
      %p174 = scmp.eq.s32.totalorder %s22, 0
      %p175 = por %p173, %p174
      %s176 = ssub.s32 %s16, %s23
      %p177 = scmp.eq.s32.totalorder %s176, 0
      %s179 = sadd.s32 %s178, 1
      %s180 = scalar_select %p177, %s178, %s179
      %p183 = pneg %p177
      %p184 = scmp.eq.s32.totalorder %s16, 1
      %p185 = por %p183, %p184
      %p186 = scmp.ne.s32.totalorder %s178, %s181
      %p187 = scmp.eq.s32.totalorder %s16, 0
      %p188 = por %p186, %p187
      %p189 = scmp.ne.s32.totalorder %s178, %s181
      %p190 = scmp.eq.s32.totalorder %s21, 1
      %p191 = por %p189, %p190
      %p192 = scmp.ne.s32.totalorder %s181, %s182
      %p193 = scmp.eq.s32.totalorder %s21, 0
      %p194 = por %p192, %p193
      %p195 = scmp.ne.s32.totalorder %s181, %s182
      %p196 = scmp.eq.s32.totalorder %s22, 1
      %p197 = por %p195, %p196
      %p199 = scmp.ne.s32.totalorder %s182, %s198
      %p200 = scmp.eq.s32.totalorder %s22, 0
      %p201 = por %p199, %p200
      %p202 = scmp.le.s32.totalorder 1, %s16
      %p203 = scmp.lt.s32.totalorder %s16, 3
      %p204 = pnand %p202, %p203
      %p205 = pneg %p204
      // Predicated region
      $region9: #{tpu_custom_call.1} parent=5 // pred_check
        _
      $region10: #{tpu_custom_call.1} parent=5 // pred_check_branch
        %207 = sbr.rel (%p204) target = $region12
      $region11: #{tpu_custom_call.1} parent=5 // pred_region
        %s208 = ssub.s32 %s16, 1
        // Predicated region
        $region13: #{tpu_custom_call.1} parent=11 // pred_check
          %p209 = pneg %p63
        $region14: #{tpu_custom_call.1} parent=11 // pred_check_branch
          %211 = sbr.rel (%p209) target = $region16
        $region15: #{tpu_custom_call.1} parent=11 // pred_region
          _
        $region16: #{tpu_custom_call.1} parent=11 // pred_fallthru
          _
        // Predicated region
        $region17: #{tpu_custom_call.1} parent=11 // pred_check
          %p212 = pneg %p84
        $region18: #{tpu_custom_call.1} parent=11 // pred_check_branch
          %214 = sbr.rel (%p212) target = $region20
        $region19: #{tpu_custom_call.1} parent=11 // pred_region
          _
        $region20: #{tpu_custom_call.1} parent=11 // pred_fallthru
          _
        // Predicated region
        $region21: #{tpu_custom_call.1} parent=11 // pred_check
          %p215 = pneg %p105
        $region22: #{tpu_custom_call.1} parent=11 // pred_check_branch
          %217 = sbr.rel (%p215) target = $region24
        $region23: #{tpu_custom_call.1} parent=11 // pred_region
          _
        $region24: #{tpu_custom_call.1} parent=11 // pred_fallthru
          _
        // Predicated region
        $region25: #{tpu_custom_call.1} parent=11 // pred_check
          %p218 = pneg %p126
        $region26: #{tpu_custom_call.1} parent=11 // pred_check_branch
          %220 = sbr.rel (%p218) target = $region28
        $region27: #{tpu_custom_call.1} parent=11 // pred_region
          _
        $region28: #{tpu_custom_call.1} parent=11 // pred_fallthru
          _
        // Predicated region
        $region29: #{tpu_custom_call.1} parent=11 // pred_check
          %p221 = pneg %p147
        $region30: #{tpu_custom_call.1} parent=11 // pred_check_branch
          %223 = sbr.rel (%p221) target = $region32
        $region31: #{tpu_custom_call.1} parent=11 // pred_region
          _
        $region32: #{tpu_custom_call.1} parent=11 // pred_fallthru
          _
        // Predicated region
        $region33: #{tpu_custom_call.1} parent=11 // pred_check
          %p224 = pneg %p168
        $region34: #{tpu_custom_call.1} parent=11 // pred_check_branch
          %226 = sbr.rel (%p224) target = $region36
        $region35: #{tpu_custom_call.1} parent=11 // pred_region
          _
        $region36: #{tpu_custom_call.1} parent=11 // pred_fallthru
          _
      $region12: #{tpu_custom_call.1} parent=5 // pred_fallthru
        _
      %p227 = scmp.lt.s32.totalorder %s16, 2
      // Predicated region
      $region37: #{tpu_custom_call.1} parent=5 // pred_check
        %p228 = pneg %p227
      $region38: #{tpu_custom_call.1} parent=5 // pred_check_branch
        %230 = sbr.rel (%p228) target = $region40
      $region39: #{tpu_custom_call.1} parent=5 // pred_region
        // Predicated region
        $region41: #{tpu_custom_call.1} parent=39 // pred_check
          %p231 = pneg %p36
        $region42: #{tpu_custom_call.1} parent=39 // pred_check_branch
          %233 = sbr.rel (%p231) target = $region44
        $region43: #{tpu_custom_call.1} parent=39 // pred_region
          %s234 = smul.u32 2, %s16
          %p235 = scmp.lt.s32.totalorder %s234, 3
          %s236 = scalar_select %p235, %s234, 3
          %s237 = smul.addr %s236, 8
          %s238 = smul.addr %s237, 8
          %s239 = scalar_lea.vmem %s0, %s238
          %s240 = smul.u32 2, %s16
        $region44: #{tpu_custom_call.1} parent=39 // pred_fallthru
          _
      $region40: #{tpu_custom_call.1} parent=5 // pred_fallthru
        _
      %p241 = scmp.le.s32.totalorder 1, %s16
      %p242 = scmp.lt.s32.totalorder %s16, 3
      %p243 = pnand %p241, %p242
      %p244 = pneg %p243
      // Predicated region
      $region45: #{tpu_custom_call.1} parent=5 // pred_check
        _
      $region46: #{tpu_custom_call.1} parent=5 // pred_check_branch
        %246 = sbr.rel (%p243) target = $region48
      $region47: #{tpu_custom_call.1} parent=5 // pred_region
        %s247 = ssub.s32 %s16, 1
        %s248 = smul.u32 2, %s21
        %p249 = scmp.lt.s32.totalorder %s248, 3
        %s250 = scalar_select %p249, %s248, 3
        %s251 = smul.addr %s250, 8
        %s252 = smul.addr %s251, 8
        %s253 = scalar_lea.vmem %s0, %s252
        %p254 = pneg %p42
        %p255 = pneg %p39
        %p256 = pneg %p63
        %p257 = pneg %p60
        %p258 = pneg %p84
        %p259 = pneg %p81
        %p260 = pneg %p105
        %p261 = pneg %p102
        %p262 = pneg %p126
        %p263 = pneg %p123
        %p264 = pneg %p147
        %p265 = pneg %p144
        %p266 = pneg %p168
        %p267 = pneg %p165
        %p268 = pneg %p194
        %p269 = pneg %p191
        %s270 = sand.u32 %s181, 1
        %s271 = scalar_lea.sflag [#allocation3], %s270
        %s272 = sand.u32 %s181, 1
        %s273 = smul.addr %s272, 128
        %s274 = scalar_lea.vmem [#allocation2], %s273
        %s275 = smul.u32 2, %s21
        %p276 = scmp.lt.s32.totalorder %s275, 3
        %s277 = scalar_select %p276, %s275, 3
        %s278 = smul.addr %s277, 8
        %s279 = smul.addr %s278, 8
        %s280 = scalar_lea.vmem %s0, %s279
        %s281 = smul.u32 2, %s21
        %s282 = smul.u32 2, %s21
        %v284 = vlaneseq
        %v285 = vand.u32 %v284, 127
        %v286 = vadd.s32 %v285, 128
        %vm287 = vcmp.lt.s32.totalorder %v285, 0
        %v288 = vsub.s32 0, %v285
        %v289 = vsel %vm287, %v288, %v285
        %v290 = vshrl.u32 %v289, 4
        %v291 = vand.u32 %v289, 15
        %v292 = vsub.s32 0, %v291
        %v293 = vsel %vm287, %v292, %v291
        %vm294 = vcmp.lt.s32.totalorder %v286, 0
        %v295 = vsub.s32 0, %v286
        %v296 = vsel %vm294, %v295, %v286
        %v297 = vshrl.u32 %v296, 4
        %v298 = vand.u32 %v296, 15
        %v299 = vsub.s32 0, %v298
        %v300 = vsel %vm294, %v299, %v298
        %vm301 = vcmp.ne.s32.totalorder %v293, 0
        %vm302 = vcmp.ne.s32.totalorder %v300, 0
        %vm303 = vcmp.lt.s32.totalorder %v293, 0
        %vm304 = vcmp.lt.s32.totalorder %v300, 0
        %vm305 = vmand %vm303, %vm301
        %vm306 = vmand %vm304, %vm302
        %v307 = vadd.s32 %v293, 16
        %v308 = vadd.s32 %v300, 16
        %v309 = vsel %vm305, %v307, %v293
        %v310 = vsel %vm306, %v308, %v300
        %vm311 = vcmp.gt.s32.totalorder %v309, 0
        %vm312 = vcmp.gt.s32.totalorder %v310, 0
        %v313 = vsel %vm311, 1.0, 0.0
        %v314 = vsel %vm312, 1.0, 0.0
        %vm315 = vcmp.lt.s32.totalorder %v309, 15
        %vm316 = vcmp.lt.s32.totalorder %v310, 15
        %v317 = vsel %vm315, 1.0, 0.0
        %v318 = vsel %vm316, 1.0, 0.0
        %vm319 = vcmp.ge.s32.totalorder %v285, 16
        %vm320 = vcmp.ge.s32.totalorder %v286, 16
        %v321 = vsel %vm319, 1.0, 0.0
        %v322 = vsel %vm320, 1.0, 0.0
        %vm323 = vcmp.lt.s32.totalorder %v285, 240
        %vm324 = vcmp.lt.s32.totalorder %v286, 240
        %v325 = vsel %vm323, 1.0, 0.0
        %v326 = vsel %vm324, 1.0, 0.0
        %v327 = vadd.f32 %v313, 1.0
        %v328 = vadd.f32 %v314, 1.0
        %v329 = vadd.f32 %v327, %v317
        %v330 = vadd.f32 %v328, %v318
        %v331 = vadd.f32 %v321, 1.0
        %v332 = vadd.f32 %v322, 1.0
        %v333 = vadd.f32 %v331, %v325
        %v334 = vadd.f32 %v332, %v326
        %v335 = vmul.f32 %v329, %v333
        %v336 = vmul.f32 %v330, %v334
        %v337 = vrcp.pop %v335
        %v338 = vmul.f32 1.0, %v337
        %v339 = vrcp.pop %v336
        %v340 = vmul.f32 1.0, %v339
        %v341 = vld [vmem:[%s1] sm:$0xff]
        %v342 = vld [vmem:[%s1 + $0x8] sm:$0xff]
        %v343 = vld [vmem:[%s1 + $0x10] sm:$0xff]
        %v344 = vld [vmem:[%s1 + $0x18] sm:$0xff]
        %v345 = vld [vmem:[%s2] sm:$0xff]
        %v346 = vld [vmem:[%s2 + $0x8] sm:$0xff]
        %v347 = vld [vmem:[%s2 + $0x10] sm:$0xff]
        %v348 = vld [vmem:[%s2 + $0x18] sm:$0xff]
        %v349 = vld [vmem:[%s4] sm:$0xff]
        %v350 = vld [vmem:[%s4 + $0x8] sm:$0xff]
        %v351 = vld [vmem:[%s4 + $0x10] sm:$0xff]
        %v352 = vld [vmem:[%s4 + $0x18] sm:$0xff]
        %v353 = vld [vmem:[%s4 + $0x20] sm:$0xff]
        %v354 = vld [vmem:[%s4 + $0x28] sm:$0xff]
        %v355 = vld [vmem:[%s4 + $0x30] sm:$0xff]
        %v356 = vld [vmem:[%s4 + $0x38] sm:$0xff]
        %v357 = vld [vmem:[%s4 + $0x40] sm:$0xff]
        %v358 = vld [vmem:[%s4 + $0x48] sm:$0xff]
        %v359 = vld [vmem:[%s4 + $0x50] sm:$0xff]
        %v360 = vld [vmem:[%s4 + $0x58] sm:$0xff]
        %v361 = vld [vmem:[%s4 + $0x60] sm:$0xff]
        %v362 = vld [vmem:[%s4 + $0x68] sm:$0xff]
        %v363 = vld [vmem:[%s4 + $0x70] sm:$0xff]
        %v364 = vld [vmem:[%s4 + $0x78] sm:$0xff]
        %v365 = vld [vmem:[%s6] sm:$0xff]
        %v366 = vld [vmem:[%s6 + $0x8] sm:$0xff]
        %v367 = vld [vmem:[%s6 + $0x10] sm:$0xff]
        %v368 = vld [vmem:[%s6 + $0x18] sm:$0xff]
        %v369 = vld [vmem:[%s3] sm:$0xf]
        %v370 = vld [vmem:[%s3 + $0x4] sm:$0xf]
        %v371 = vld [vmem:[%s3 + $0x8] sm:$0xf]
        %v372 = vld [vmem:[%s3 + $0xc] sm:$0xf]
        %v373 = vld [vmem:[%s3 + $0x10] sm:$0xf]
        %v374 = vld [vmem:[%s3 + $0x14] sm:$0xf]
        %v375 = vld [vmem:[%s3 + $0x18] sm:$0xf]
        %v376 = vld [vmem:[%s3 + $0x1c] sm:$0xf]
        %v377 = vld [vmem:[%s3 + $0x20] sm:$0xf]
        %v378 = vld [vmem:[%s3 + $0x24] sm:$0xf]
        %v379 = vld [vmem:[%s3 + $0x28] sm:$0xf]
        %v380 = vld [vmem:[%s3 + $0x2c] sm:$0xf]
        %v381 = vld [vmem:[%s3 + $0x30] sm:$0xf]
        %v382 = vld [vmem:[%s3 + $0x34] sm:$0xf]
        %v383 = vld [vmem:[%s3 + $0x38] sm:$0xf]
        %v384 = vld [vmem:[%s3 + $0x3c] sm:$0xf]
        %v385 = vld [vmem:[%s5] sm:$0xf]
        %v386 = vld [vmem:[%s5 + $0x4] sm:$0xf]
        %v387 = vld [vmem:[%s5 + $0x8] sm:$0xf]
        %v388 = vld [vmem:[%s5 + $0xc] sm:$0xf]
        %v389 = vld [vmem:[%s280] sm:$0xff]
        %v390 = vld [vmem:[%s280 + $0x8] sm:$0xff]
        %v391 = vld [vmem:[%s280 + $0x10] sm:$0xff]
        %v392 = vld [vmem:[%s280 + $0x18] sm:$0xff]
        %v393 = vld [vmem:[%s280 + $0x20] sm:$0xff]
        %v394 = vld [vmem:[%s280 + $0x28] sm:$0xff]
        %v395 = vld [vmem:[%s280 + $0x30] sm:$0xff]
        %v396 = vld [vmem:[%s280 + $0x38] sm:$0xff]
        %v397 = vadd.f32 %v389, %v390
        %v398 = vadd.f32 %v397, %v391
        %v399 = vadd.f32 %v398, %v392
        %v400 = vadd.f32 %v399, %v393
        %v401 = vadd.f32 %v400, %v394
        %v402 = vadd.f32 %v401, %v395
        %v403 = vadd.f32 %v402, %v396
        %404 = vadd.xlane.f32.xlu0 %v403
        %v405 = vpop.xlane.xlu0 %404
        %v406 = vrot.slane %v405, 4
        %v407 = vadd.f32 %v405, %v406
        %v408 = vrot.slane %v407, 2
        %v409 = vadd.f32 %v407, %v408
        %v410 = vrot.slane %v409, 1
        %v411 = vadd.f32 %v409, %v410
        %s412 = vtos %v411
        %v413 = vmul.f32 %v389, %v389
        %v414 = vmul.f32 %v390, %v390
        %v415 = vmul.f32 %v391, %v391
        %v416 = vmul.f32 %v392, %v392
        %v417 = vmul.f32 %v393, %v393
        %v418 = vmul.f32 %v394, %v394
        %v419 = vmul.f32 %v395, %v395
        %v420 = vmul.f32 %v396, %v396
        %v421 = vadd.f32 %v413, %v414
        %v422 = vadd.f32 %v421, %v415
        %v423 = vadd.f32 %v422, %v416
        %v424 = vadd.f32 %v423, %v417
        %v425 = vadd.f32 %v424, %v418
        %v426 = vadd.f32 %v425, %v419
        %v427 = vadd.f32 %v426, %v420
        %428 = vadd.xlane.f32.xlu0 %v427
        %v429 = vpop.xlane.xlu0 %428
        %v430 = vrot.slane %v429, 4
        %v431 = vadd.f32 %v429, %v430
        %v432 = vrot.slane %v431, 2
        %v433 = vadd.f32 %v431, %v432
        %v434 = vrot.slane %v433, 1
        %v435 = vadd.f32 %v433, %v434
        %s436 = vtos %v435
        %s437 = smul.f32 %s412, 0.00012207031
        %s438 = smul.f32 %s436, 0.00012207031
        %s439 = smul.f32 %s437, %s437
        %s440 = ssub.f32 %s438, %s439
        %v441 = vstv %s437
        %v442 = vsub.f32 %v389, %v441
        %v443 = vsub.f32 %v390, %v441
        %v444 = vsub.f32 %v391, %v441
        %v445 = vsub.f32 %v392, %v441
        %v446 = vsub.f32 %v393, %v441
        %v447 = vsub.f32 %v394, %v441
        %v448 = vsub.f32 %v395, %v441
        %v449 = vsub.f32 %v396, %v441
        %s450 = sadd.f32 %s440, 1e-05
        %v451 = vstv %s450
        %v452 = vrsqrt.pop %v451
        %s453 = vtos %v452
        %v454 = vstv %s453
        %v455 = vmul.f32 %v442, %v454
        %v456 = vmul.f32 %v443, %v454
        %v457 = vmul.f32 %v444, %v454
        %v458 = vmul.f32 %v445, %v454
        %v459 = vmul.f32 %v446, %v454
        %v460 = vmul.f32 %v447, %v454
        %v461 = vmul.f32 %v448, %v454
        %v462 = vmul.f32 %v449, %v454
        %464 = vset.pattern.permute.xlu0 0
        %465 = vperm.xlu0 %464, %v341
        %v466 = vpop.permute.xlu0 %465
        %469 = vset.pattern.permute.xlu0 0
        %470 = vperm.xlu0 %469, %v342
        %v471 = vpop.permute.xlu0 %470
        %474 = vset.pattern.permute.xlu0 0
        %475 = vperm.xlu0 %474, %v343
        %v476 = vpop.permute.xlu0 %475
        %479 = vset.pattern.permute.xlu0 0
        %480 = vperm.xlu0 %479, %v344
        %v481 = vpop.permute.xlu0 %480
        %v483 = vmul.f32 %v455, %v466
        %v484 = vmul.f32 %v456, %v466
        %v485 = vmul.f32 %v457, %v471
        %v486 = vmul.f32 %v458, %v471
        %v487 = vmul.f32 %v459, %v476
        %v488 = vmul.f32 %v460, %v476
        %v489 = vmul.f32 %v461, %v481
        %v490 = vmul.f32 %v462, %v481
        %492 = vset.pattern.permute.xlu0 0
        %493 = vperm.xlu0 %492, %v345
        %v494 = vpop.permute.xlu0 %493
        %497 = vset.pattern.permute.xlu0 0
        %498 = vperm.xlu0 %497, %v346
        %v499 = vpop.permute.xlu0 %498
        %502 = vset.pattern.permute.xlu0 0
        %503 = vperm.xlu0 %502, %v347
        %v504 = vpop.permute.xlu0 %503
        %507 = vset.pattern.permute.xlu0 0
        %508 = vperm.xlu0 %507, %v348
        %v509 = vpop.permute.xlu0 %508
        %v511 = vadd.f32 %v483, %v494
        %v512 = vadd.f32 %v484, %v494
        %v513 = vadd.f32 %v485, %v499
        %v514 = vadd.f32 %v486, %v499
        %v515 = vadd.f32 %v487, %v504
        %v516 = vadd.f32 %v488, %v504
        %v517 = vadd.f32 %v489, %v509
        %v518 = vadd.f32 %v490, %v509
        %519 = vrot.lane.b32.xlu0 %v511, 1
        %v520 = vpop.permute.xlu0 %519
        %521 = vrot.lane.b32.xlu0 %v513, 1
        %v522 = vpop.permute.xlu0 %521
        %523 = vrot.lane.b32.xlu0 %v515, 1
        %v524 = vpop.permute.xlu0 %523
        %525 = vrot.lane.b32.xlu0 %v517, 1
        %v526 = vpop.permute.xlu0 %525
        %527 = vrot.lane.b32.xlu0 %v512, 1
        %v528 = vpop.permute.xlu0 %527
        %529 = vrot.lane.b32.xlu0 %v514, 1
        %v530 = vpop.permute.xlu0 %529
        %531 = vrot.lane.b32.xlu0 %v516, 1
        %v532 = vpop.permute.xlu0 %531
        %533 = vrot.lane.b32.xlu0 %v518, 1
        %v534 = vpop.permute.xlu0 %533
        %vm535 = vcmp.lt.s32.totalorder %v285, 1
        %v536 = vsel %vm535, %v520, %v528
        %v537 = vsel %vm535, %v522, %v530
        %v538 = vsel %vm535, %v524, %v532
        %v539 = vsel %vm535, %v526, %v534
        %v540 = vsel %vm535, %v528, %v520
        %v541 = vsel %vm535, %v530, %v522
        %v542 = vsel %vm535, %v532, %v524
        %v543 = vsel %vm535, %v534, %v526
        %v544 = vmul.f32 %v313, %v540
        %v545 = vmul.f32 %v314, %v536
        %v546 = vmul.f32 %v313, %v541
        %v547 = vmul.f32 %v314, %v537
        %v548 = vmul.f32 %v313, %v542
        %v549 = vmul.f32 %v314, %v538
        %v550 = vmul.f32 %v313, %v543
        %v551 = vmul.f32 %v314, %v539
        %v552 = vadd.f32 %v511, %v544
        %v553 = vadd.f32 %v512, %v545
        %v554 = vadd.f32 %v513, %v546
        %v555 = vadd.f32 %v514, %v547
        %v556 = vadd.f32 %v515, %v548
        %v557 = vadd.f32 %v516, %v549
        %v558 = vadd.f32 %v517, %v550
        %v559 = vadd.f32 %v518, %v551
        %560 = vrot.lane.b32.xlu0 %v511, 127
        %v561 = vpop.permute.xlu0 %560
        %562 = vrot.lane.b32.xlu0 %v513, 127
        %v563 = vpop.permute.xlu0 %562
        %564 = vrot.lane.b32.xlu0 %v515, 127
        %v565 = vpop.permute.xlu0 %564
        %566 = vrot.lane.b32.xlu0 %v517, 127
        %v567 = vpop.permute.xlu0 %566
        %568 = vrot.lane.b32.xlu0 %v512, 127
        %v569 = vpop.permute.xlu0 %568
        %570 = vrot.lane.b32.xlu0 %v514, 127
        %v571 = vpop.permute.xlu0 %570
        %572 = vrot.lane.b32.xlu0 %v516, 127
        %v573 = vpop.permute.xlu0 %572
        %574 = vrot.lane.b32.xlu0 %v518, 127
        %v575 = vpop.permute.xlu0 %574
        %vm576 = vcmp.lt.s32.totalorder %v285, 127
        %v577 = vsel %vm576, %v561, %v569
        %v578 = vsel %vm576, %v563, %v571
        %v579 = vsel %vm576, %v565, %v573
        %v580 = vsel %vm576, %v567, %v575
        %v581 = vsel %vm576, %v569, %v561
        %v582 = vsel %vm576, %v571, %v563
        %v583 = vsel %vm576, %v573, %v565
        %v584 = vsel %vm576, %v575, %v567
        %v585 = vmul.f32 %v317, %v577
        %v586 = vmul.f32 %v318, %v581
        %v587 = vmul.f32 %v317, %v578
        %v588 = vmul.f32 %v318, %v582
        %v589 = vmul.f32 %v317, %v579
        %v590 = vmul.f32 %v318, %v583
        %v591 = vmul.f32 %v317, %v580
        %v592 = vmul.f32 %v318, %v584
        %v593 = vadd.f32 %v552, %v585
        %v594 = vadd.f32 %v553, %v586
        %v595 = vadd.f32 %v554, %v587
        %v596 = vadd.f32 %v555, %v588
        %v597 = vadd.f32 %v556, %v589
        %v598 = vadd.f32 %v557, %v590
        %v599 = vadd.f32 %v558, %v591
        %v600 = vadd.f32 %v559, %v592
        %601 = vrot.lane.b32.xlu0 %v593, 16
        %v602 = vpop.permute.xlu0 %601
        %603 = vrot.lane.b32.xlu0 %v595, 16
        %v604 = vpop.permute.xlu0 %603
        %605 = vrot.lane.b32.xlu0 %v597, 16
        %v606 = vpop.permute.xlu0 %605
        %607 = vrot.lane.b32.xlu0 %v599, 16
        %v608 = vpop.permute.xlu0 %607
        %609 = vrot.lane.b32.xlu0 %v594, 16
        %v610 = vpop.permute.xlu0 %609
        %611 = vrot.lane.b32.xlu0 %v596, 16
        %v612 = vpop.permute.xlu0 %611
        %613 = vrot.lane.b32.xlu0 %v598, 16
        %v614 = vpop.permute.xlu0 %613
        %615 = vrot.lane.b32.xlu0 %v600, 16
        %v616 = vpop.permute.xlu0 %615
        %vm617 = vcmp.lt.s32.totalorder %v285, 16
        %v618 = vsel %vm617, %v602, %v610
        %v619 = vsel %vm617, %v604, %v612
        %v620 = vsel %vm617, %v606, %v614
        %v621 = vsel %vm617, %v608, %v616
        %v622 = vsel %vm617, %v610, %v602
        %v623 = vsel %vm617, %v612, %v604
        %v624 = vsel %vm617, %v614, %v606
        %v625 = vsel %vm617, %v616, %v608
        %v626 = vmul.f32 %v321, %v622
        %v627 = vmul.f32 %v322, %v618
        %v628 = vmul.f32 %v321, %v623
        %v629 = vmul.f32 %v322, %v619
        %v630 = vmul.f32 %v321, %v624
        %v631 = vmul.f32 %v322, %v620
        %v632 = vmul.f32 %v321, %v625
        %v633 = vmul.f32 %v322, %v621
        %v634 = vadd.f32 %v593, %v626
        %v635 = vadd.f32 %v594, %v627
        %v636 = vadd.f32 %v595, %v628
        %v637 = vadd.f32 %v596, %v629
        %v638 = vadd.f32 %v597, %v630
        %v639 = vadd.f32 %v598, %v631
        %v640 = vadd.f32 %v599, %v632
        %v641 = vadd.f32 %v600, %v633
        %642 = vrot.lane.b32.xlu0 %v593, 112
        %v643 = vpop.permute.xlu0 %642
        %644 = vrot.lane.b32.xlu0 %v595, 112
        %v645 = vpop.permute.xlu0 %644
        %646 = vrot.lane.b32.xlu0 %v597, 112
        %v647 = vpop.permute.xlu0 %646
        %648 = vrot.lane.b32.xlu0 %v599, 112
        %v649 = vpop.permute.xlu0 %648
        %650 = vrot.lane.b32.xlu0 %v594, 112
        %v651 = vpop.permute.xlu0 %650
        %652 = vrot.lane.b32.xlu0 %v596, 112
        %v653 = vpop.permute.xlu0 %652
        %654 = vrot.lane.b32.xlu0 %v598, 112
        %v655 = vpop.permute.xlu0 %654
        %656 = vrot.lane.b32.xlu0 %v600, 112
        %v657 = vpop.permute.xlu0 %656
        %vm658 = vcmp.lt.s32.totalorder %v285, 112
        %v659 = vsel %vm658, %v643, %v651
        %v660 = vsel %vm658, %v645, %v653
        %v661 = vsel %vm658, %v647, %v655
        %v662 = vsel %vm658, %v649, %v657
        %v663 = vsel %vm658, %v651, %v643
        %v664 = vsel %vm658, %v653, %v645
        %v665 = vsel %vm658, %v655, %v647
        %v666 = vsel %vm658, %v657, %v649
        %v667 = vmul.f32 %v325, %v659
        %v668 = vmul.f32 %v326, %v663
        %v669 = vmul.f32 %v325, %v660
        %v670 = vmul.f32 %v326, %v664
        %v671 = vmul.f32 %v325, %v661
        %v672 = vmul.f32 %v326, %v665
        %v673 = vmul.f32 %v325, %v662
        %v674 = vmul.f32 %v326, %v666
        %v675 = vadd.f32 %v634, %v667
        %v676 = vadd.f32 %v635, %v668
        %v677 = vadd.f32 %v636, %v669
        %v678 = vadd.f32 %v637, %v670
        %v679 = vadd.f32 %v638, %v671
        %v680 = vadd.f32 %v639, %v672
        %v681 = vadd.f32 %v640, %v673
        %v682 = vadd.f32 %v641, %v674
        %v683 = vmul.f32 %v675, %v338
        %v684 = vmul.f32 %v676, %v340
        %v685 = vmul.f32 %v677, %v338
        %v686 = vmul.f32 %v678, %v340
        %v687 = vmul.f32 %v679, %v338
        %v688 = vmul.f32 %v680, %v340
        %v689 = vmul.f32 %v681, %v338
        %v690 = vmul.f32 %v682, %v340
        %v691 = vadd.f32 %v389, %v683
        %v692 = vadd.f32 %v390, %v684
        %v693 = vadd.f32 %v391, %v685
        %v694 = vadd.f32 %v392, %v686
        %v695 = vadd.f32 %v393, %v687
        %v696 = vadd.f32 %v394, %v688
        %v697 = vadd.f32 %v395, %v689
        %v698 = vadd.f32 %v396, %v690
        %v699 = vsub.f32 %v691, %v511
        %v700 = vsub.f32 %v692, %v512
        %v701 = vsub.f32 %v693, %v513
        %v702 = vsub.f32 %v694, %v514
        %v703 = vsub.f32 %v695, %v515
        %v704 = vsub.f32 %v696, %v516
        %v705 = vsub.f32 %v697, %v517
        %v706 = vsub.f32 %v698, %v518
        %v707 = vadd.f32 %v699, %v700
        %v708 = vadd.f32 %v707, %v701
        %v709 = vadd.f32 %v708, %v702
        %v710 = vadd.f32 %v709, %v703
        %v711 = vadd.f32 %v710, %v704
        %v712 = vadd.f32 %v711, %v705
        %v713 = vadd.f32 %v712, %v706
        %714 = vadd.xlane.f32.xlu0 %v713
        %v715 = vpop.xlane.xlu0 %714
        %v716 = vrot.slane %v715, 4
        %v717 = vadd.f32 %v715, %v716
        %v718 = vrot.slane %v717, 2
        %v719 = vadd.f32 %v717, %v718
        %v720 = vrot.slane %v719, 1
        %v721 = vadd.f32 %v719, %v720
        %s722 = vtos %v721
        %v723 = vmul.f32 %v699, %v699
        %v724 = vmul.f32 %v700, %v700
        %v725 = vmul.f32 %v701, %v701
        %v726 = vmul.f32 %v702, %v702
        %v727 = vmul.f32 %v703, %v703
        %v728 = vmul.f32 %v704, %v704
        %v729 = vmul.f32 %v705, %v705
        %v730 = vmul.f32 %v706, %v706
        %v731 = vadd.f32 %v723, %v724
        %v732 = vadd.f32 %v731, %v725
        %v733 = vadd.f32 %v732, %v726
        %v734 = vadd.f32 %v733, %v727
        %v735 = vadd.f32 %v734, %v728
        %v736 = vadd.f32 %v735, %v729
        %v737 = vadd.f32 %v736, %v730
        %738 = vadd.xlane.f32.xlu0 %v737
        %v739 = vpop.xlane.xlu0 %738
        %v740 = vrot.slane %v739, 4
        %v741 = vadd.f32 %v739, %v740
        %v742 = vrot.slane %v741, 2
        %v743 = vadd.f32 %v741, %v742
        %v744 = vrot.slane %v743, 1
        %v745 = vadd.f32 %v743, %v744
        %s746 = vtos %v745
        %s747 = smul.f32 %s722, 0.00012207031
        %s748 = smul.f32 %s746, 0.00012207031
        %s749 = smul.f32 %s747, %s747
        %s750 = ssub.f32 %s748, %s749
        %v751 = vstv %s747
        %v752 = vsub.f32 %v699, %v751
        %v753 = vsub.f32 %v700, %v751
        %v754 = vsub.f32 %v701, %v751
        %v755 = vsub.f32 %v702, %v751
        %v756 = vsub.f32 %v703, %v751
        %v757 = vsub.f32 %v704, %v751
        %v758 = vsub.f32 %v705, %v751
        %v759 = vsub.f32 %v706, %v751
        %s760 = sadd.f32 %s750, 1e-05
        %v761 = vstv %s760
        %v762 = vrsqrt.pop %v761
        %s763 = vtos %v762
        %v764 = vstv %s763
        %v765 = vmul.f32 %v752, %v764
        %v766 = vmul.f32 %v753, %v764
        %v767 = vmul.f32 %v754, %v764
        %v768 = vmul.f32 %v755, %v764
        %v769 = vmul.f32 %v756, %v764
        %v770 = vmul.f32 %v757, %v764
        %v771 = vmul.f32 %v758, %v764
        %v772 = vmul.f32 %v759, %v764
        %v773 = vpack.c.bf16 %v767, %v765
        %v774 = vpack.c.bf16 %v768, %v766
        %v775 = vpack.c.bf16 %v771, %v769
        %v776 = vpack.c.bf16 %v772, %v770
        %778 = vset.pattern.permute.xlu0 0
        %779 = vperm.xlu0 %778, %v349
        %v780 = vpop.permute.xlu0 %779
        %783 = vset.pattern.permute.xlu0 0
        %784 = vperm.xlu0 %783, %v350
        %v785 = vpop.permute.xlu0 %784
        %788 = vset.pattern.permute.xlu0 0
        %789 = vperm.xlu0 %788, %v351
        %v790 = vpop.permute.xlu0 %789
        %793 = vset.pattern.permute.xlu0 0
        %794 = vperm.xlu0 %793, %v352
        %v795 = vpop.permute.xlu0 %794
        %798 = vset.pattern.permute.xlu0 0
        %799 = vperm.xlu0 %798, %v353
        %v800 = vpop.permute.xlu0 %799
        %803 = vset.pattern.permute.xlu0 0
        %804 = vperm.xlu0 %803, %v354
        %v805 = vpop.permute.xlu0 %804
        %808 = vset.pattern.permute.xlu0 0
        %809 = vperm.xlu0 %808, %v355
        %v810 = vpop.permute.xlu0 %809
        %813 = vset.pattern.permute.xlu0 0
        %814 = vperm.xlu0 %813, %v356
        %v815 = vpop.permute.xlu0 %814
        %818 = vset.pattern.permute.xlu0 0
        %819 = vperm.xlu0 %818, %v357
        %v820 = vpop.permute.xlu0 %819
        %823 = vset.pattern.permute.xlu0 0
        %824 = vperm.xlu0 %823, %v358
        %v825 = vpop.permute.xlu0 %824
        %828 = vset.pattern.permute.xlu0 0
        %829 = vperm.xlu0 %828, %v359
        %v830 = vpop.permute.xlu0 %829
        %833 = vset.pattern.permute.xlu0 0
        %834 = vperm.xlu0 %833, %v360
        %v835 = vpop.permute.xlu0 %834
        %838 = vset.pattern.permute.xlu0 0
        %839 = vperm.xlu0 %838, %v361
        %v840 = vpop.permute.xlu0 %839
        %843 = vset.pattern.permute.xlu0 0
        %844 = vperm.xlu0 %843, %v362
        %v845 = vpop.permute.xlu0 %844
        %848 = vset.pattern.permute.xlu0 0
        %849 = vperm.xlu0 %848, %v363
        %v850 = vpop.permute.xlu0 %849
        %853 = vset.pattern.permute.xlu0 0
        %854 = vperm.xlu0 %853, %v364
        %v855 = vpop.permute.xlu0 %854
        %v873 = vunpack.c.l.b16 %v369
        %v874 = vunpack.c.l.b16 %v370
        %v875 = vunpack.c.l.b16 %v371
        %v876 = vunpack.c.l.b16 %v372
        %v877 = vunpack.c.l.b16 %v373
        %v878 = vunpack.c.l.b16 %v374
        %v879 = vunpack.c.l.b16 %v375
        %v880 = vunpack.c.l.b16 %v376
        %v881 = vunpack.c.l.b16 %v377
        %v882 = vunpack.c.l.b16 %v378
        %v883 = vunpack.c.l.b16 %v379
        %v884 = vunpack.c.l.b16 %v380
        %v885 = vunpack.c.l.b16 %v381
        %v886 = vunpack.c.l.b16 %v382
        %v887 = vunpack.c.l.b16 %v383
        %v888 = vunpack.c.l.b16 %v384
        %v889 = vpack.c.b16 %v874, %v873
        %v890 = vpack.c.b16 %v876, %v875
        %v891 = vpack.c.b16 %v878, %v877
        %v892 = vpack.c.b16 %v880, %v879
        %v893 = vpack.c.b16 %v882, %v881
        %v894 = vpack.c.b16 %v884, %v883
        %v895 = vpack.c.b16 %v886, %v885
        %v896 = vpack.c.b16 %v888, %v887
        %vm897 = vcmask 261120
        %v899 = vsel %vm897, %v889, 0
        %v902 = vsel %vm897, %v890, 0
        %v905 = vsel %vm897, %v891, 0
        %v908 = vsel %vm897, %v892, 0
        %v911 = vsel %vm897, %v893, 0
        %v914 = vsel %vm897, %v894, 0
        %v917 = vsel %vm897, %v895, 0
        %v920 = vsel %vm897, %v896, 0
        %922 = vmatprep.subr.bf16.mxu0 0
        %923 = vmatpush1.bf16.msra.mxu0 0
        %924 = vmatprep.subr.bf16.mxu0 0
        %925 = vmatpush1.bf16.msra.mxu0 0
        %926 = vmatprep.subr.bf16.mxu0 0
        %927 = vmatpush1.bf16.msra.mxu0 0
        %928 = vmatprep.subr.bf16.mxu0 0
        %929 = vmatpush1.bf16.msra.mxu0 0
        %930 = vmatprep.subr.bf16.mxu0 0
        %931 = vmatpush1.bf16.msra.mxu0 0
        %932 = vmatprep.subr.bf16.mxu0 0
        %933 = vmatpush1.bf16.msra.mxu0 0
        %934 = vmatprep.subr.bf16.mxu0 %v776
        %935 = vmatpush1.bf16.msra.mxu0 %v775
        %936 = vmatprep.subr.bf16.mxu0 %v774
        %937 = vmatpush1.bf16.msra.mxu0 %v773
        %938 = vmatprep.subr.bf16.mxu0 0
        %939 = vmatpush2.bf16.msra.mxu0 0
        %940 = vmatprep.subr.bf16.mxu0 0
        %941 = vmatpush2.bf16.msra.mxu0 0
        %942 = vmatprep.subr.bf16.mxu0 0
        %943 = vmatpush2.bf16.msra.mxu0 0
        %944 = vmatprep.subr.bf16.mxu0 0
        %945 = vmatpush2.bf16.msra.mxu0 0
        %946 = vmatprep.subr.bf16.mxu0 0
        %947 = vmatpush2.bf16.msra.mxu0 0
        %948 = vmatprep.subr.bf16.mxu0 0
        %949 = vmatpush2.bf16.msra.mxu0 0
        %950 = vmatprep.subr.bf16.mxu0 0
        %951 = vmatpush2.bf16.msra.mxu0 0
        %952 = vmatprep.subr.bf16.mxu0 0
        %953 = vmatpush2.bf16.msra.mxu0 0
        %954 = vmatprep.mubr.bf16.mxu0 0
        %955 = vmatmul.mubr.bf16.gmra.mxu0 %v899
        %v956 = vpop.f32.mrf.mxu0
        %v957 = vadd.f32 %v780, %v956
        %v958 = vpop.f32.mrf.mxu0
        %v959 = vadd.f32 %v780, %v958
        %v960 = vpop.f32.mrf.mxu0
        %v961 = vadd.f32 %v785, %v960
        %v962 = vpop.f32.mrf.mxu0
        %v963 = vadd.f32 %v785, %v962
        %964 = vmatprep.mubr.bf16.mxu0 0
        %965 = vmatmul.mubr.bf16.gmra.mxu0 %v902
        %v966 = vpop.f32.mrf.mxu0
        %v967 = vadd.f32 %v790, %v966
        %v968 = vpop.f32.mrf.mxu0
        %v969 = vadd.f32 %v790, %v968
        %v970 = vpop.f32.mrf.mxu0
        %v971 = vadd.f32 %v795, %v970
        %v972 = vpop.f32.mrf.mxu0
        %v973 = vadd.f32 %v795, %v972
        %974 = vmatprep.mubr.bf16.mxu0 0
        %975 = vmatmul.mubr.bf16.gmra.mxu0 %v905
        %v976 = vpop.f32.mrf.mxu0
        %v977 = vadd.f32 %v800, %v976
        %v978 = vpop.f32.mrf.mxu0
        %v979 = vadd.f32 %v800, %v978
        %v980 = vpop.f32.mrf.mxu0
        %v981 = vadd.f32 %v805, %v980
        %v982 = vpop.f32.mrf.mxu0
        %v983 = vadd.f32 %v805, %v982
        %984 = vmatprep.mubr.bf16.mxu0 0
        %985 = vmatmul.mubr.bf16.gmra.mxu0 %v908
        %v986 = vpop.f32.mrf.mxu0
        %v987 = vadd.f32 %v810, %v986
        %v988 = vpop.f32.mrf.mxu0
        %v989 = vadd.f32 %v810, %v988
        %v990 = vpop.f32.mrf.mxu0
        %v991 = vadd.f32 %v815, %v990
        %v992 = vpop.f32.mrf.mxu0
        %v993 = vadd.f32 %v815, %v992
        %994 = vmatprep.mubr.bf16.mxu0 0
        %995 = vmatmul.mubr.bf16.gmra.mxu0 %v911
        %v996 = vpop.f32.mrf.mxu0
        %v997 = vadd.f32 %v820, %v996
        %v998 = vpop.f32.mrf.mxu0
        %v999 = vadd.f32 %v820, %v998
        %v1000 = vpop.f32.mrf.mxu0
        %v1001 = vadd.f32 %v825, %v1000
        %v1002 = vpop.f32.mrf.mxu0
        %v1003 = vadd.f32 %v825, %v1002
        %1004 = vmatprep.mubr.bf16.mxu0 0
        %1005 = vmatmul.mubr.bf16.gmra.mxu0 %v914
        %v1006 = vpop.f32.mrf.mxu0
        %v1007 = vadd.f32 %v830, %v1006
        %v1008 = vpop.f32.mrf.mxu0
        %v1009 = vadd.f32 %v830, %v1008
        %v1010 = vpop.f32.mrf.mxu0
        %v1011 = vadd.f32 %v835, %v1010
        %v1012 = vpop.f32.mrf.mxu0
        %v1013 = vadd.f32 %v835, %v1012
        %1014 = vmatprep.mubr.bf16.mxu0 0
        %1015 = vmatmul.mubr.bf16.gmra.mxu0 %v917
        %v1016 = vpop.f32.mrf.mxu0
        %v1017 = vadd.f32 %v840, %v1016
        %v1018 = vpop.f32.mrf.mxu0
        %v1019 = vadd.f32 %v840, %v1018
        %v1020 = vpop.f32.mrf.mxu0
        %v1021 = vadd.f32 %v845, %v1020
        %v1022 = vpop.f32.mrf.mxu0
        %v1023 = vadd.f32 %v845, %v1022
        %1024 = vmatprep.mubr.bf16.mxu0 0
        %1025 = vmatmul.mubr.bf16.gmra.mxu0 %v920
        %v1026 = vpop.f32.mrf.mxu0
        %v1027 = vadd.f32 %v850, %v1026
        %v1028 = vpop.f32.mrf.mxu0
        %v1029 = vadd.f32 %v850, %v1028
        %v1030 = vpop.f32.mrf.mxu0
        %v1031 = vadd.f32 %v855, %v1030
        %v1032 = vpop.f32.mrf.mxu0
        %v1033 = vadd.f32 %v855, %v1032
        %1034 = vdwg.mxu0
        %v1035 = vmax.f32 %v957, 0.0
        %v1036 = vmax.f32 %v959, 0.0
        %v1037 = vmax.f32 %v961, 0.0
        %v1038 = vmax.f32 %v963, 0.0
        %v1039 = vmax.f32 %v967, 0.0
        %v1040 = vmax.f32 %v969, 0.0
        %v1041 = vmax.f32 %v971, 0.0
        %v1042 = vmax.f32 %v973, 0.0
        %v1043 = vmax.f32 %v977, 0.0
        %v1044 = vmax.f32 %v979, 0.0
        %v1045 = vmax.f32 %v981, 0.0
        %v1046 = vmax.f32 %v983, 0.0
        %v1047 = vmax.f32 %v987, 0.0
        %v1048 = vmax.f32 %v989, 0.0
        %v1049 = vmax.f32 %v991, 0.0
        %v1050 = vmax.f32 %v993, 0.0
        %v1051 = vmax.f32 %v997, 0.0
        %v1052 = vmax.f32 %v999, 0.0
        %v1053 = vmax.f32 %v1001, 0.0
        %v1054 = vmax.f32 %v1003, 0.0
        %v1055 = vmax.f32 %v1007, 0.0
        %v1056 = vmax.f32 %v1009, 0.0
        %v1057 = vmax.f32 %v1011, 0.0
        %v1058 = vmax.f32 %v1013, 0.0
        %v1059 = vmax.f32 %v1017, 0.0
        %v1060 = vmax.f32 %v1019, 0.0
        %v1061 = vmax.f32 %v1021, 0.0
        %v1062 = vmax.f32 %v1023, 0.0
        %v1063 = vmax.f32 %v1027, 0.0
        %v1064 = vmax.f32 %v1029, 0.0
        %v1065 = vmax.f32 %v1031, 0.0
        %v1066 = vmax.f32 %v1033, 0.0
        %v1067 = vmul.f32 %v1035, %v1035
        %v1068 = vmul.f32 %v1036, %v1036
        %v1069 = vmul.f32 %v1037, %v1037
        %v1070 = vmul.f32 %v1038, %v1038
        %v1071 = vmul.f32 %v1039, %v1039
        %v1072 = vmul.f32 %v1040, %v1040
        %v1073 = vmul.f32 %v1041, %v1041
        %v1074 = vmul.f32 %v1042, %v1042
        %v1075 = vmul.f32 %v1043, %v1043
        %v1076 = vmul.f32 %v1044, %v1044
        %v1077 = vmul.f32 %v1045, %v1045
        %v1078 = vmul.f32 %v1046, %v1046
        %v1079 = vmul.f32 %v1047, %v1047
        %v1080 = vmul.f32 %v1048, %v1048
        %v1081 = vmul.f32 %v1049, %v1049
        %v1082 = vmul.f32 %v1050, %v1050
        %v1083 = vmul.f32 %v1051, %v1051
        %v1084 = vmul.f32 %v1052, %v1052
        %v1085 = vmul.f32 %v1053, %v1053
        %v1086 = vmul.f32 %v1054, %v1054
        %v1087 = vmul.f32 %v1055, %v1055
        %v1088 = vmul.f32 %v1056, %v1056
        %v1089 = vmul.f32 %v1057, %v1057
        %v1090 = vmul.f32 %v1058, %v1058
        %v1091 = vmul.f32 %v1059, %v1059
        %v1092 = vmul.f32 %v1060, %v1060
        %v1093 = vmul.f32 %v1061, %v1061
        %v1094 = vmul.f32 %v1062, %v1062
        %v1095 = vmul.f32 %v1063, %v1063
        %v1096 = vmul.f32 %v1064, %v1064
        %v1097 = vmul.f32 %v1065, %v1065
        %v1098 = vmul.f32 %v1066, %v1066
        %v1099 = vpack.c.bf16 %v1069, %v1067
        %v1100 = vpack.c.bf16 %v1070, %v1068
        %v1101 = vpack.c.bf16 %v1073, %v1071
        %v1102 = vpack.c.bf16 %v1074, %v1072
        %v1103 = vpack.c.bf16 %v1077, %v1075
        %v1104 = vpack.c.bf16 %v1078, %v1076
        %v1105 = vpack.c.bf16 %v1081, %v1079
        %v1106 = vpack.c.bf16 %v1082, %v1080
        %v1107 = vpack.c.bf16 %v1085, %v1083
        %v1108 = vpack.c.bf16 %v1086, %v1084
        %v1109 = vpack.c.bf16 %v1089, %v1087
        %v1110 = vpack.c.bf16 %v1090, %v1088
        %v1111 = vpack.c.bf16 %v1093, %v1091
        %v1112 = vpack.c.bf16 %v1094, %v1092
        %v1113 = vpack.c.bf16 %v1097, %v1095
        %v1114 = vpack.c.bf16 %v1098, %v1096
        %1116 = vset.pattern.permute.xlu0 0
        %1117 = vperm.xlu0 %1116, %v365
        %v1118 = vpop.permute.xlu0 %1117
        %1121 = vset.pattern.permute.xlu0 0
        %1122 = vperm.xlu0 %1121, %v366
        %v1123 = vpop.permute.xlu0 %1122
        %1126 = vset.pattern.permute.xlu0 0
        %1127 = vperm.xlu0 %1126, %v367
        %v1128 = vpop.permute.xlu0 %1127
        %1131 = vset.pattern.permute.xlu0 0
        %1132 = vperm.xlu0 %1131, %v368
        %v1133 = vpop.permute.xlu0 %1132
        %v1139 = vunpack.c.l.b16 %v385
        %v1140 = vunpack.c.l.b16 %v386
        %v1141 = vunpack.c.l.b16 %v387
        %v1142 = vunpack.c.l.b16 %v388
        %v1143 = vpack.c.b16 %v1140, %v1139
        %v1144 = vpack.c.b16 %v1142, %v1141
        %1147 = vmatprep.subr.bf16.mxu0 %v1114
        %1148 = vmatpush1.bf16.msra.mxu0 %v1113
        %1149 = vmatprep.subr.bf16.mxu0 %v1112
        %1150 = vmatpush1.bf16.msra.mxu0 %v1111
        %1151 = vmatprep.subr.bf16.mxu0 %v1110
        %1152 = vmatpush1.bf16.msra.mxu0 %v1109
        %1153 = vmatprep.subr.bf16.mxu0 %v1108
        %1154 = vmatpush1.bf16.msra.mxu0 %v1107
        %1155 = vmatprep.subr.bf16.mxu0 %v1106
        %1156 = vmatpush1.bf16.msra.mxu0 %v1105
        %1157 = vmatprep.subr.bf16.mxu0 %v1104
        %1158 = vmatpush1.bf16.msra.mxu0 %v1103
        %1159 = vmatprep.subr.bf16.mxu0 %v1102
        %1160 = vmatpush1.bf16.msra.mxu0 %v1101
        %1161 = vmatprep.subr.bf16.mxu0 %v1100
        %1162 = vmatpush1.bf16.msra.mxu0 %v1099
        %1163 = vmatprep.subr.bf16.mxu0 0
        %1164 = vmatpush2.bf16.msra.mxu0 0
        %1165 = vmatprep.subr.bf16.mxu0 0
        %1166 = vmatpush2.bf16.msra.mxu0 0
        %1167 = vmatprep.subr.bf16.mxu0 0
        %1168 = vmatpush2.bf16.msra.mxu0 0
        %1169 = vmatprep.subr.bf16.mxu0 0
        %1170 = vmatpush2.bf16.msra.mxu0 0
        %1171 = vmatprep.subr.bf16.mxu0 0
        %1172 = vmatpush2.bf16.msra.mxu0 0
        %1173 = vmatprep.subr.bf16.mxu0 0
        %1174 = vmatpush2.bf16.msra.mxu0 0
        %1175 = vmatprep.subr.bf16.mxu0 0
        %1176 = vmatpush2.bf16.msra.mxu0 0
        %1177 = vmatprep.subr.bf16.mxu0 0
        %1178 = vmatpush2.bf16.msra.mxu0 0
        %1179 = vmatprep.mubr.bf16.mxu0 0
        %1180 = vmatmul.mubr.bf16.gmra.mxu0 %v1143
        %v1181 = vpop.f32.mrf.mxu0
        %v1182 = vadd.f32 %v1118, %v1181
        %v1183 = vpop.f32.mrf.mxu0
        %v1184 = vadd.f32 %v1118, %v1183
        %v1185 = vpop.f32.mrf.mxu0
        %v1186 = vadd.f32 %v1123, %v1185
        %v1187 = vpop.f32.mrf.mxu0
        %v1188 = vadd.f32 %v1123, %v1187
        %1189 = vmatprep.mubr.bf16.mxu0 0
        %1190 = vmatmul.mubr.bf16.gmra.mxu0 %v1144
        %v1191 = vpop.f32.mrf.mxu0
        %v1192 = vadd.f32 %v1128, %v1191
        %v1193 = vpop.f32.mrf.mxu0
        %v1194 = vadd.f32 %v1128, %v1193
        %v1195 = vpop.f32.mrf.mxu0
        %v1196 = vadd.f32 %v1133, %v1195
        %v1197 = vpop.f32.mrf.mxu0
        %v1198 = vadd.f32 %v1133, %v1197
        %1199 = vdwg.mxu0
        %v1200 = vadd.f32 %v699, %v1182
        %v1201 = vadd.f32 %v700, %v1184
        %v1202 = vadd.f32 %v701, %v1186
        %v1203 = vadd.f32 %v702, %v1188
        %v1204 = vadd.f32 %v703, %v1192
        %v1205 = vadd.f32 %v704, %v1194
        %v1206 = vadd.f32 %v705, %v1196
        %v1207 = vadd.f32 %v706, %v1198
        %1208 = vst [vmem:[%s274] sm:$0xff] %v1200
        %1209 = vst [vmem:[%s274 + $0x8] sm:$0xff] %v1201
        %1210 = vst [vmem:[%s274 + $0x10] sm:$0xff] %v1202
        %1211 = vst [vmem:[%s274 + $0x18] sm:$0xff] %v1203
        %1212 = vst [vmem:[%s274 + $0x20] sm:$0xff] %v1204
        %1213 = vst [vmem:[%s274 + $0x28] sm:$0xff] %v1205
        %1214 = vst [vmem:[%s274 + $0x30] sm:$0xff] %v1206
        %1215 = vst [vmem:[%s274 + $0x38] sm:$0xff] %v1207
        %s1216 = scalar_lea.vmem %s280, 64
        %v1217 = vld [vmem:[%s1216] sm:$0xff]
        %v1218 = vld [vmem:[%s1216 + $0x8] sm:$0xff]
        %v1219 = vld [vmem:[%s1216 + $0x10] sm:$0xff]
        %v1220 = vld [vmem:[%s1216 + $0x18] sm:$0xff]
        %v1221 = vld [vmem:[%s1216 + $0x20] sm:$0xff]
        %v1222 = vld [vmem:[%s1216 + $0x28] sm:$0xff]
        %v1223 = vld [vmem:[%s1216 + $0x30] sm:$0xff]
        %v1224 = vld [vmem:[%s1216 + $0x38] sm:$0xff]
        %v1225 = vadd.f32 %v1217, %v1218
        %v1226 = vadd.f32 %v1225, %v1219
        %v1227 = vadd.f32 %v1226, %v1220
        %v1228 = vadd.f32 %v1227, %v1221
        %v1229 = vadd.f32 %v1228, %v1222
        %v1230 = vadd.f32 %v1229, %v1223
        %v1231 = vadd.f32 %v1230, %v1224
        %1232 = vadd.xlane.f32.xlu0 %v1231
        %v1233 = vpop.xlane.xlu0 %1232
        %v1234 = vrot.slane %v1233, 4
        %v1235 = vadd.f32 %v1233, %v1234
        %v1236 = vrot.slane %v1235, 2
        %v1237 = vadd.f32 %v1235, %v1236
        %v1238 = vrot.slane %v1237, 1
        %v1239 = vadd.f32 %v1237, %v1238
        %s1240 = vtos %v1239
        %v1241 = vmul.f32 %v1217, %v1217
        %v1242 = vmul.f32 %v1218, %v1218
        %v1243 = vmul.f32 %v1219, %v1219
        %v1244 = vmul.f32 %v1220, %v1220
        %v1245 = vmul.f32 %v1221, %v1221
        %v1246 = vmul.f32 %v1222, %v1222
        %v1247 = vmul.f32 %v1223, %v1223
        %v1248 = vmul.f32 %v1224, %v1224
        %v1249 = vadd.f32 %v1241, %v1242
        %v1250 = vadd.f32 %v1249, %v1243
        %v1251 = vadd.f32 %v1250, %v1244
        %v1252 = vadd.f32 %v1251, %v1245
        %v1253 = vadd.f32 %v1252, %v1246
        %v1254 = vadd.f32 %v1253, %v1247
        %v1255 = vadd.f32 %v1254, %v1248
        %1256 = vadd.xlane.f32.xlu0 %v1255
        %v1257 = vpop.xlane.xlu0 %1256
        %v1258 = vrot.slane %v1257, 4
        %v1259 = vadd.f32 %v1257, %v1258
        %v1260 = vrot.slane %v1259, 2
        %v1261 = vadd.f32 %v1259, %v1260
        %v1262 = vrot.slane %v1261, 1
        %v1263 = vadd.f32 %v1261, %v1262
        %s1264 = vtos %v1263
        %s1265 = smul.f32 %s1240, 0.00012207031
        %s1266 = smul.f32 %s1264, 0.00012207031
        %s1267 = smul.f32 %s1265, %s1265
        %s1268 = ssub.f32 %s1266, %s1267
        %v1269 = vstv %s1265
        %v1270 = vsub.f32 %v1217, %v1269
        %v1271 = vsub.f32 %v1218, %v1269
        %v1272 = vsub.f32 %v1219, %v1269
        %v1273 = vsub.f32 %v1220, %v1269
        %v1274 = vsub.f32 %v1221, %v1269
        %v1275 = vsub.f32 %v1222, %v1269
        %v1276 = vsub.f32 %v1223, %v1269
        %v1277 = vsub.f32 %v1224, %v1269
        %s1278 = sadd.f32 %s1268, 1e-05
        %v1279 = vstv %s1278
        %v1280 = vrsqrt.pop %v1279
        %s1281 = vtos %v1280
        %v1282 = vstv %s1281
        %v1283 = vmul.f32 %v1270, %v1282
        %v1284 = vmul.f32 %v1271, %v1282
        %v1285 = vmul.f32 %v1272, %v1282
        %v1286 = vmul.f32 %v1273, %v1282
        %v1287 = vmul.f32 %v1274, %v1282
        %v1288 = vmul.f32 %v1275, %v1282
        %v1289 = vmul.f32 %v1276, %v1282
        %v1290 = vmul.f32 %v1277, %v1282
        %v1291 = vmul.f32 %v1283, %v466
        %v1292 = vmul.f32 %v1284, %v466
        %v1293 = vmul.f32 %v1285, %v471
        %v1294 = vmul.f32 %v1286, %v471
        %v1295 = vmul.f32 %v1287, %v476
        %v1296 = vmul.f32 %v1288, %v476
        %v1297 = vmul.f32 %v1289, %v481
        %v1298 = vmul.f32 %v1290, %v481
        %v1299 = vadd.f32 %v1291, %v494
        %v1300 = vadd.f32 %v1292, %v494
        %v1301 = vadd.f32 %v1293, %v499
        %v1302 = vadd.f32 %v1294, %v499
        %v1303 = vadd.f32 %v1295, %v504
        %v1304 = vadd.f32 %v1296, %v504
        %v1305 = vadd.f32 %v1297, %v509
        %v1306 = vadd.f32 %v1298, %v509
        %1307 = vrot.lane.b32.xlu0 %v1299, 1
        %v1308 = vpop.permute.xlu0 %1307
        %1309 = vrot.lane.b32.xlu0 %v1301, 1
        %v1310 = vpop.permute.xlu0 %1309
        %1311 = vrot.lane.b32.xlu0 %v1303, 1
        %v1312 = vpop.permute.xlu0 %1311
        %1313 = vrot.lane.b32.xlu0 %v1305, 1
        %v1314 = vpop.permute.xlu0 %1313
        %1315 = vrot.lane.b32.xlu0 %v1300, 1
        %v1316 = vpop.permute.xlu0 %1315
        %1317 = vrot.lane.b32.xlu0 %v1302, 1
        %v1318 = vpop.permute.xlu0 %1317
        %1319 = vrot.lane.b32.xlu0 %v1304, 1
        %v1320 = vpop.permute.xlu0 %1319
        %1321 = vrot.lane.b32.xlu0 %v1306, 1
        %v1322 = vpop.permute.xlu0 %1321
        %v1323 = vsel %vm535, %v1308, %v1316
        %v1324 = vsel %vm535, %v1310, %v1318
        %v1325 = vsel %vm535, %v1312, %v1320
        %v1326 = vsel %vm535, %v1314, %v1322
        %v1327 = vsel %vm535, %v1316, %v1308
        %v1328 = vsel %vm535, %v1318, %v1310
        %v1329 = vsel %vm535, %v1320, %v1312
        %v1330 = vsel %vm535, %v1322, %v1314
        %v1331 = vmul.f32 %v313, %v1327
        %v1332 = vmul.f32 %v314, %v1323
        %v1333 = vmul.f32 %v313, %v1328
        %v1334 = vmul.f32 %v314, %v1324
        %v1335 = vmul.f32 %v313, %v1329
        %v1336 = vmul.f32 %v314, %v1325
        %v1337 = vmul.f32 %v313, %v1330
        %v1338 = vmul.f32 %v314, %v1326
        %v1339 = vadd.f32 %v1299, %v1331
        %v1340 = vadd.f32 %v1300, %v1332
        %v1341 = vadd.f32 %v1301, %v1333
        %v1342 = vadd.f32 %v1302, %v1334
        %v1343 = vadd.f32 %v1303, %v1335
        %v1344 = vadd.f32 %v1304, %v1336
        %v1345 = vadd.f32 %v1305, %v1337
        %v1346 = vadd.f32 %v1306, %v1338
        %1347 = vrot.lane.b32.xlu0 %v1299, 127
        %v1348 = vpop.permute.xlu0 %1347
        %1349 = vrot.lane.b32.xlu0 %v1301, 127
        %v1350 = vpop.permute.xlu0 %1349
        %1351 = vrot.lane.b32.xlu0 %v1303, 127
        %v1352 = vpop.permute.xlu0 %1351
        %1353 = vrot.lane.b32.xlu0 %v1305, 127
        %v1354 = vpop.permute.xlu0 %1353
        %1355 = vrot.lane.b32.xlu0 %v1300, 127
        %v1356 = vpop.permute.xlu0 %1355
        %1357 = vrot.lane.b32.xlu0 %v1302, 127
        %v1358 = vpop.permute.xlu0 %1357
        %1359 = vrot.lane.b32.xlu0 %v1304, 127
        %v1360 = vpop.permute.xlu0 %1359
        %1361 = vrot.lane.b32.xlu0 %v1306, 127
        %v1362 = vpop.permute.xlu0 %1361
        %v1363 = vsel %vm576, %v1348, %v1356
        %v1364 = vsel %vm576, %v1350, %v1358
        %v1365 = vsel %vm576, %v1352, %v1360
        %v1366 = vsel %vm576, %v1354, %v1362
        %v1367 = vsel %vm576, %v1356, %v1348
        %v1368 = vsel %vm576, %v1358, %v1350
        %v1369 = vsel %vm576, %v1360, %v1352
        %v1370 = vsel %vm576, %v1362, %v1354
        %v1371 = vmul.f32 %v317, %v1363
        %v1372 = vmul.f32 %v318, %v1367
        %v1373 = vmul.f32 %v317, %v1364
        %v1374 = vmul.f32 %v318, %v1368
        %v1375 = vmul.f32 %v317, %v1365
        %v1376 = vmul.f32 %v318, %v1369
        %v1377 = vmul.f32 %v317, %v1366
        %v1378 = vmul.f32 %v318, %v1370
        %v1379 = vadd.f32 %v1339, %v1371
        %v1380 = vadd.f32 %v1340, %v1372
        %v1381 = vadd.f32 %v1341, %v1373
        %v1382 = vadd.f32 %v1342, %v1374
        %v1383 = vadd.f32 %v1343, %v1375
        %v1384 = vadd.f32 %v1344, %v1376
        %v1385 = vadd.f32 %v1345, %v1377
        %v1386 = vadd.f32 %v1346, %v1378
        %1387 = vrot.lane.b32.xlu0 %v1379, 16
        %v1388 = vpop.permute.xlu0 %1387
        %1389 = vrot.lane.b32.xlu0 %v1381, 16
        %v1390 = vpop.permute.xlu0 %1389
        %1391 = vrot.lane.b32.xlu0 %v1383, 16
        %v1392 = vpop.permute.xlu0 %1391
        %1393 = vrot.lane.b32.xlu0 %v1385, 16
        %v1394 = vpop.permute.xlu0 %1393
        %1395 = vrot.lane.b32.xlu0 %v1380, 16
        %v1396 = vpop.permute.xlu0 %1395
        %1397 = vrot.lane.b32.xlu0 %v1382, 16
        %v1398 = vpop.permute.xlu0 %1397
        %1399 = vrot.lane.b32.xlu0 %v1384, 16
        %v1400 = vpop.permute.xlu0 %1399
        %1401 = vrot.lane.b32.xlu0 %v1386, 16
        %v1402 = vpop.permute.xlu0 %1401
        %v1403 = vsel %vm617, %v1388, %v1396
        %v1404 = vsel %vm617, %v1390, %v1398
        %v1405 = vsel %vm617, %v1392, %v1400
        %v1406 = vsel %vm617, %v1394, %v1402
        %v1407 = vsel %vm617, %v1396, %v1388
        %v1408 = vsel %vm617, %v1398, %v1390
        %v1409 = vsel %vm617, %v1400, %v1392
        %v1410 = vsel %vm617, %v1402, %v1394
        %v1411 = vmul.f32 %v321, %v1407
        %v1412 = vmul.f32 %v322, %v1403
        %v1413 = vmul.f32 %v321, %v1408
        %v1414 = vmul.f32 %v322, %v1404
        %v1415 = vmul.f32 %v321, %v1409
        %v1416 = vmul.f32 %v322, %v1405
        %v1417 = vmul.f32 %v321, %v1410
        %v1418 = vmul.f32 %v322, %v1406
        %v1419 = vadd.f32 %v1379, %v1411
        %v1420 = vadd.f32 %v1380, %v1412
        %v1421 = vadd.f32 %v1381, %v1413
        %v1422 = vadd.f32 %v1382, %v1414
        %v1423 = vadd.f32 %v1383, %v1415
        %v1424 = vadd.f32 %v1384, %v1416
        %v1425 = vadd.f32 %v1385, %v1417
        %v1426 = vadd.f32 %v1386, %v1418
        %1427 = vrot.lane.b32.xlu0 %v1379, 112
        %v1428 = vpop.permute.xlu0 %1427
        %1429 = vrot.lane.b32.xlu0 %v1381, 112
        %v1430 = vpop.permute.xlu0 %1429
        %1431 = vrot.lane.b32.xlu0 %v1383, 112
        %v1432 = vpop.permute.xlu0 %1431
        %1433 = vrot.lane.b32.xlu0 %v1385, 112
        %v1434 = vpop.permute.xlu0 %1433
        %1435 = vrot.lane.b32.xlu0 %v1380, 112
        %v1436 = vpop.permute.xlu0 %1435
        %1437 = vrot.lane.b32.xlu0 %v1382, 112
        %v1438 = vpop.permute.xlu0 %1437
        %1439 = vrot.lane.b32.xlu0 %v1384, 112
        %v1440 = vpop.permute.xlu0 %1439
        %1441 = vrot.lane.b32.xlu0 %v1386, 112
        %v1442 = vpop.permute.xlu0 %1441
        %v1443 = vsel %vm658, %v1428, %v1436
        %v1444 = vsel %vm658, %v1430, %v1438
        %v1445 = vsel %vm658, %v1432, %v1440
        %v1446 = vsel %vm658, %v1434, %v1442
        %v1447 = vsel %vm658, %v1436, %v1428
        %v1448 = vsel %vm658, %v1438, %v1430
        %v1449 = vsel %vm658, %v1440, %v1432
        %v1450 = vsel %vm658, %v1442, %v1434
        %v1451 = vmul.f32 %v325, %v1443
        %v1452 = vmul.f32 %v326, %v1447
        %v1453 = vmul.f32 %v325, %v1444
        %v1454 = vmul.f32 %v326, %v1448
        %v1455 = vmul.f32 %v325, %v1445
        %v1456 = vmul.f32 %v326, %v1449
        %v1457 = vmul.f32 %v325, %v1446
        %v1458 = vmul.f32 %v326, %v1450
        %v1459 = vadd.f32 %v1419, %v1451
        %v1460 = vadd.f32 %v1420, %v1452
        %v1461 = vadd.f32 %v1421, %v1453
        %v1462 = vadd.f32 %v1422, %v1454
        %v1463 = vadd.f32 %v1423, %v1455
        %v1464 = vadd.f32 %v1424, %v1456
        %v1465 = vadd.f32 %v1425, %v1457
        %v1466 = vadd.f32 %v1426, %v1458
        %v1467 = vmul.f32 %v1459, %v338
        %v1468 = vmul.f32 %v1460, %v340
        %v1469 = vmul.f32 %v1461, %v338
        %v1470 = vmul.f32 %v1462, %v340
        %v1471 = vmul.f32 %v1463, %v338
        %v1472 = vmul.f32 %v1464, %v340
        %v1473 = vmul.f32 %v1465, %v338
        %v1474 = vmul.f32 %v1466, %v340
        %v1475 = vadd.f32 %v1217, %v1467
        %v1476 = vadd.f32 %v1218, %v1468
        %v1477 = vadd.f32 %v1219, %v1469
        %v1478 = vadd.f32 %v1220, %v1470
        %v1479 = vadd.f32 %v1221, %v1471
        %v1480 = vadd.f32 %v1222, %v1472
        %v1481 = vadd.f32 %v1223, %v1473
        %v1482 = vadd.f32 %v1224, %v1474
        %v1483 = vsub.f32 %v1475, %v1299
        %v1484 = vsub.f32 %v1476, %v1300
        %v1485 = vsub.f32 %v1477, %v1301
        %v1486 = vsub.f32 %v1478, %v1302
        %v1487 = vsub.f32 %v1479, %v1303
        %v1488 = vsub.f32 %v1480, %v1304
        %v1489 = vsub.f32 %v1481, %v1305
        %v1490 = vsub.f32 %v1482, %v1306
        %v1491 = vadd.f32 %v1483, %v1484
        %v1492 = vadd.f32 %v1491, %v1485
        %v1493 = vadd.f32 %v1492, %v1486
        %v1494 = vadd.f32 %v1493, %v1487
        %v1495 = vadd.f32 %v1494, %v1488
        %v1496 = vadd.f32 %v1495, %v1489
        %v1497 = vadd.f32 %v1496, %v1490
        %1498 = vadd.xlane.f32.xlu0 %v1497
        %v1499 = vpop.xlane.xlu0 %1498
        %v1500 = vrot.slane %v1499, 4
        %v1501 = vadd.f32 %v1499, %v1500
        %v1502 = vrot.slane %v1501, 2
        %v1503 = vadd.f32 %v1501, %v1502
        %v1504 = vrot.slane %v1503, 1
        %v1505 = vadd.f32 %v1503, %v1504
        %s1506 = vtos %v1505
        %v1507 = vmul.f32 %v1483, %v1483
        %v1508 = vmul.f32 %v1484, %v1484
        %v1509 = vmul.f32 %v1485, %v1485
        %v1510 = vmul.f32 %v1486, %v1486
        %v1511 = vmul.f32 %v1487, %v1487
        %v1512 = vmul.f32 %v1488, %v1488
        %v1513 = vmul.f32 %v1489, %v1489
        %v1514 = vmul.f32 %v1490, %v1490
        %v1515 = vadd.f32 %v1507, %v1508
        %v1516 = vadd.f32 %v1515, %v1509
        %v1517 = vadd.f32 %v1516, %v1510
        %v1518 = vadd.f32 %v1517, %v1511
        %v1519 = vadd.f32 %v1518, %v1512
        %v1520 = vadd.f32 %v1519, %v1513
        %v1521 = vadd.f32 %v1520, %v1514
        %1522 = vadd.xlane.f32.xlu0 %v1521
        %v1523 = vpop.xlane.xlu0 %1522
        %v1524 = vrot.slane %v1523, 4
        %v1525 = vadd.f32 %v1523, %v1524
        %v1526 = vrot.slane %v1525, 2
        %v1527 = vadd.f32 %v1525, %v1526
        %v1528 = vrot.slane %v1527, 1
        %v1529 = vadd.f32 %v1527, %v1528
        %s1530 = vtos %v1529
        %s1531 = smul.f32 %s1506, 0.00012207031
        %s1532 = smul.f32 %s1530, 0.00012207031
        %s1533 = smul.f32 %s1531, %s1531
        %s1534 = ssub.f32 %s1532, %s1533
        %v1535 = vstv %s1531
        %v1536 = vsub.f32 %v1483, %v1535
        %v1537 = vsub.f32 %v1484, %v1535
        %v1538 = vsub.f32 %v1485, %v1535
        %v1539 = vsub.f32 %v1486, %v1535
        %v1540 = vsub.f32 %v1487, %v1535
        %v1541 = vsub.f32 %v1488, %v1535
        %v1542 = vsub.f32 %v1489, %v1535
        %v1543 = vsub.f32 %v1490, %v1535
        %s1544 = sadd.f32 %s1534, 1e-05
        %v1545 = vstv %s1544
        %v1546 = vrsqrt.pop %v1545
        %s1547 = vtos %v1546
        %v1548 = vstv %s1547
        %v1549 = vmul.f32 %v1536, %v1548
        %v1550 = vmul.f32 %v1537, %v1548
        %v1551 = vmul.f32 %v1538, %v1548
        %v1552 = vmul.f32 %v1539, %v1548
        %v1553 = vmul.f32 %v1540, %v1548
        %v1554 = vmul.f32 %v1541, %v1548
        %v1555 = vmul.f32 %v1542, %v1548
        %v1556 = vmul.f32 %v1543, %v1548
        %v1557 = vpack.c.bf16 %v1551, %v1549
        %v1558 = vpack.c.bf16 %v1552, %v1550
        %v1559 = vpack.c.bf16 %v1555, %v1553
        %v1560 = vpack.c.bf16 %v1556, %v1554
        %1561 = vmatprep.subr.bf16.mxu0 0
        %1562 = vmatpush1.bf16.msra.mxu0 0
        %1563 = vmatprep.subr.bf16.mxu0 0
        %1564 = vmatpush1.bf16.msra.mxu0 0
        %1565 = vmatprep.subr.bf16.mxu0 0
        %1566 = vmatpush1.bf16.msra.mxu0 0
        %1567 = vmatprep.subr.bf16.mxu0 0
        %1568 = vmatpush1.bf16.msra.mxu0 0
        %1569 = vmatprep.subr.bf16.mxu0 0
        %1570 = vmatpush1.bf16.msra.mxu0 0
        %1571 = vmatprep.subr.bf16.mxu0 0
        %1572 = vmatpush1.bf16.msra.mxu0 0
        %1573 = vmatprep.subr.bf16.mxu0 %v1560
        %1574 = vmatpush1.bf16.msra.mxu0 %v1559
        %1575 = vmatprep.subr.bf16.mxu0 %v1558
        %1576 = vmatpush1.bf16.msra.mxu0 %v1557
        %1577 = vmatprep.subr.bf16.mxu0 0
        %1578 = vmatpush2.bf16.msra.mxu0 0
        %1579 = vmatprep.subr.bf16.mxu0 0
        %1580 = vmatpush2.bf16.msra.mxu0 0
        %1581 = vmatprep.subr.bf16.mxu0 0
        %1582 = vmatpush2.bf16.msra.mxu0 0
        %1583 = vmatprep.subr.bf16.mxu0 0
        %1584 = vmatpush2.bf16.msra.mxu0 0
        %1585 = vmatprep.subr.bf16.mxu0 0
        %1586 = vmatpush2.bf16.msra.mxu0 0
        %1587 = vmatprep.subr.bf16.mxu0 0
        %1588 = vmatpush2.bf16.msra.mxu0 0
        %1589 = vmatprep.subr.bf16.mxu0 0
        %1590 = vmatpush2.bf16.msra.mxu0 0
        %1591 = vmatprep.subr.bf16.mxu0 0
        %1592 = vmatpush2.bf16.msra.mxu0 0
        %1593 = vmatprep.mubr.bf16.mxu0 0
        %1594 = vmatmul.mubr.bf16.gmra.mxu0 %v899
        %v1595 = vpop.f32.mrf.mxu0
        %v1596 = vadd.f32 %v780, %v1595
        %v1597 = vpop.f32.mrf.mxu0
        %v1598 = vadd.f32 %v780, %v1597
        %v1599 = vpop.f32.mrf.mxu0
        %v1600 = vadd.f32 %v785, %v1599
        %v1601 = vpop.f32.mrf.mxu0
        %v1602 = vadd.f32 %v785, %v1601
        %1603 = vmatprep.mubr.bf16.mxu0 0
        %1604 = vmatmul.mubr.bf16.gmra.mxu0 %v902
        %v1605 = vpop.f32.mrf.mxu0
        %v1606 = vadd.f32 %v790, %v1605
        %v1607 = vpop.f32.mrf.mxu0
        %v1608 = vadd.f32 %v790, %v1607
        %v1609 = vpop.f32.mrf.mxu0
        %v1610 = vadd.f32 %v795, %v1609
        %v1611 = vpop.f32.mrf.mxu0
        %v1612 = vadd.f32 %v795, %v1611
        %1613 = vmatprep.mubr.bf16.mxu0 0
        %1614 = vmatmul.mubr.bf16.gmra.mxu0 %v905
        %v1615 = vpop.f32.mrf.mxu0
        %v1616 = vadd.f32 %v800, %v1615
        %v1617 = vpop.f32.mrf.mxu0
        %v1618 = vadd.f32 %v800, %v1617
        %v1619 = vpop.f32.mrf.mxu0
        %v1620 = vadd.f32 %v805, %v1619
        %v1621 = vpop.f32.mrf.mxu0
        %v1622 = vadd.f32 %v805, %v1621
        %1623 = vmatprep.mubr.bf16.mxu0 0
        %1624 = vmatmul.mubr.bf16.gmra.mxu0 %v908
        %v1625 = vpop.f32.mrf.mxu0
        %v1626 = vadd.f32 %v810, %v1625
        %v1627 = vpop.f32.mrf.mxu0
        %v1628 = vadd.f32 %v810, %v1627
        %v1629 = vpop.f32.mrf.mxu0
        %v1630 = vadd.f32 %v815, %v1629
        %v1631 = vpop.f32.mrf.mxu0
        %v1632 = vadd.f32 %v815, %v1631
        %1633 = vmatprep.mubr.bf16.mxu0 0
        %1634 = vmatmul.mubr.bf16.gmra.mxu0 %v911
        %v1635 = vpop.f32.mrf.mxu0
        %v1636 = vadd.f32 %v820, %v1635
        %v1637 = vpop.f32.mrf.mxu0
        %v1638 = vadd.f32 %v820, %v1637
        %v1639 = vpop.f32.mrf.mxu0
        %v1640 = vadd.f32 %v825, %v1639
        %v1641 = vpop.f32.mrf.mxu0
        %v1642 = vadd.f32 %v825, %v1641
        %1643 = vmatprep.mubr.bf16.mxu0 0
        %1644 = vmatmul.mubr.bf16.gmra.mxu0 %v914
        %v1645 = vpop.f32.mrf.mxu0
        %v1646 = vadd.f32 %v830, %v1645
        %v1647 = vpop.f32.mrf.mxu0
        %v1648 = vadd.f32 %v830, %v1647
        %v1649 = vpop.f32.mrf.mxu0
        %v1650 = vadd.f32 %v835, %v1649
        %v1651 = vpop.f32.mrf.mxu0
        %v1652 = vadd.f32 %v835, %v1651
        %1653 = vmatprep.mubr.bf16.mxu0 0
        %1654 = vmatmul.mubr.bf16.gmra.mxu0 %v917
        %v1655 = vpop.f32.mrf.mxu0
        %v1656 = vadd.f32 %v840, %v1655
        %v1657 = vpop.f32.mrf.mxu0
        %v1658 = vadd.f32 %v840, %v1657
        %v1659 = vpop.f32.mrf.mxu0
        %v1660 = vadd.f32 %v845, %v1659
        %v1661 = vpop.f32.mrf.mxu0
        %v1662 = vadd.f32 %v845, %v1661
        %1663 = vmatprep.mubr.bf16.mxu0 0
        %1664 = vmatmul.mubr.bf16.gmra.mxu0 %v920
        %v1665 = vpop.f32.mrf.mxu0
        %v1666 = vadd.f32 %v850, %v1665
        %v1667 = vpop.f32.mrf.mxu0
        %v1668 = vadd.f32 %v850, %v1667
        %v1669 = vpop.f32.mrf.mxu0
        %v1670 = vadd.f32 %v855, %v1669
        %v1671 = vpop.f32.mrf.mxu0
        %v1672 = vadd.f32 %v855, %v1671
        %1673 = vdwg.mxu0
        %v1674 = vmax.f32 %v1596, 0.0
        %v1675 = vmax.f32 %v1598, 0.0
        %v1676 = vmax.f32 %v1600, 0.0
        %v1677 = vmax.f32 %v1602, 0.0
        %v1678 = vmax.f32 %v1606, 0.0
        %v1679 = vmax.f32 %v1608, 0.0
        %v1680 = vmax.f32 %v1610, 0.0
        %v1681 = vmax.f32 %v1612, 0.0
        %v1682 = vmax.f32 %v1616, 0.0
        %v1683 = vmax.f32 %v1618, 0.0
        %v1684 = vmax.f32 %v1620, 0.0
        %v1685 = vmax.f32 %v1622, 0.0
        %v1686 = vmax.f32 %v1626, 0.0
        %v1687 = vmax.f32 %v1628, 0.0
        %v1688 = vmax.f32 %v1630, 0.0
        %v1689 = vmax.f32 %v1632, 0.0
        %v1690 = vmax.f32 %v1636, 0.0
        %v1691 = vmax.f32 %v1638, 0.0
        %v1692 = vmax.f32 %v1640, 0.0
        %v1693 = vmax.f32 %v1642, 0.0
        %v1694 = vmax.f32 %v1646, 0.0
        %v1695 = vmax.f32 %v1648, 0.0
        %v1696 = vmax.f32 %v1650, 0.0
        %v1697 = vmax.f32 %v1652, 0.0
        %v1698 = vmax.f32 %v1656, 0.0
        %v1699 = vmax.f32 %v1658, 0.0
        %v1700 = vmax.f32 %v1660, 0.0
        %v1701 = vmax.f32 %v1662, 0.0
        %v1702 = vmax.f32 %v1666, 0.0
        %v1703 = vmax.f32 %v1668, 0.0
        %v1704 = vmax.f32 %v1670, 0.0
        %v1705 = vmax.f32 %v1672, 0.0
        %v1706 = vmul.f32 %v1674, %v1674
        %v1707 = vmul.f32 %v1675, %v1675
        %v1708 = vmul.f32 %v1676, %v1676
        %v1709 = vmul.f32 %v1677, %v1677
        %v1710 = vmul.f32 %v1678, %v1678
        %v1711 = vmul.f32 %v1679, %v1679
        %v1712 = vmul.f32 %v1680, %v1680
        %v1713 = vmul.f32 %v1681, %v1681
        %v1714 = vmul.f32 %v1682, %v1682
        %v1715 = vmul.f32 %v1683, %v1683
        %v1716 = vmul.f32 %v1684, %v1684
        %v1717 = vmul.f32 %v1685, %v1685
        %v1718 = vmul.f32 %v1686, %v1686
        %v1719 = vmul.f32 %v1687, %v1687
        %v1720 = vmul.f32 %v1688, %v1688
        %v1721 = vmul.f32 %v1689, %v1689
        %v1722 = vmul.f32 %v1690, %v1690
        %v1723 = vmul.f32 %v1691, %v1691
        %v1724 = vmul.f32 %v1692, %v1692
        %v1725 = vmul.f32 %v1693, %v1693
        %v1726 = vmul.f32 %v1694, %v1694
        %v1727 = vmul.f32 %v1695, %v1695
        %v1728 = vmul.f32 %v1696, %v1696
        %v1729 = vmul.f32 %v1697, %v1697
        %v1730 = vmul.f32 %v1698, %v1698
        %v1731 = vmul.f32 %v1699, %v1699
        %v1732 = vmul.f32 %v1700, %v1700
        %v1733 = vmul.f32 %v1701, %v1701
        %v1734 = vmul.f32 %v1702, %v1702
        %v1735 = vmul.f32 %v1703, %v1703
        %v1736 = vmul.f32 %v1704, %v1704
        %v1737 = vmul.f32 %v1705, %v1705
        %v1738 = vpack.c.bf16 %v1708, %v1706
        %v1739 = vpack.c.bf16 %v1709, %v1707
        %v1740 = vpack.c.bf16 %v1712, %v1710
        %v1741 = vpack.c.bf16 %v1713, %v1711
        %v1742 = vpack.c.bf16 %v1716, %v1714
        %v1743 = vpack.c.bf16 %v1717, %v1715
        %v1744 = vpack.c.bf16 %v1720, %v1718
        %v1745 = vpack.c.bf16 %v1721, %v1719
        %v1746 = vpack.c.bf16 %v1724, %v1722
        %v1747 = vpack.c.bf16 %v1725, %v1723
        %v1748 = vpack.c.bf16 %v1728, %v1726
        %v1749 = vpack.c.bf16 %v1729, %v1727
        %v1750 = vpack.c.bf16 %v1732, %v1730
        %v1751 = vpack.c.bf16 %v1733, %v1731
        %v1752 = vpack.c.bf16 %v1736, %v1734
        %v1753 = vpack.c.bf16 %v1737, %v1735
        %1754 = vmatprep.subr.bf16.mxu0 %v1753
        %1755 = vmatpush1.bf16.msra.mxu0 %v1752
        %1756 = vmatprep.subr.bf16.mxu0 %v1751
        %1757 = vmatpush1.bf16.msra.mxu0 %v1750
        %1758 = vmatprep.subr.bf16.mxu0 %v1749
        %1759 = vmatpush1.bf16.msra.mxu0 %v1748
        %1760 = vmatprep.subr.bf16.mxu0 %v1747
        %1761 = vmatpush1.bf16.msra.mxu0 %v1746
        %1762 = vmatprep.subr.bf16.mxu0 %v1745
        %1763 = vmatpush1.bf16.msra.mxu0 %v1744
        %1764 = vmatprep.subr.bf16.mxu0 %v1743
        %1765 = vmatpush1.bf16.msra.mxu0 %v1742
        %1766 = vmatprep.subr.bf16.mxu0 %v1741
        %1767 = vmatpush1.bf16.msra.mxu0 %v1740
        %1768 = vmatprep.subr.bf16.mxu0 %v1739
        %1769 = vmatpush1.bf16.msra.mxu0 %v1738
        %1770 = vmatprep.subr.bf16.mxu0 0
        %1771 = vmatpush2.bf16.msra.mxu0 0
        %1772 = vmatprep.subr.bf16.mxu0 0
        %1773 = vmatpush2.bf16.msra.mxu0 0
        %1774 = vmatprep.subr.bf16.mxu0 0
        %1775 = vmatpush2.bf16.msra.mxu0 0
        %1776 = vmatprep.subr.bf16.mxu0 0
        %1777 = vmatpush2.bf16.msra.mxu0 0
        %1778 = vmatprep.subr.bf16.mxu0 0
        %1779 = vmatpush2.bf16.msra.mxu0 0
        %1780 = vmatprep.subr.bf16.mxu0 0
        %1781 = vmatpush2.bf16.msra.mxu0 0
        %1782 = vmatprep.subr.bf16.mxu0 0
        %1783 = vmatpush2.bf16.msra.mxu0 0
        %1784 = vmatprep.subr.bf16.mxu0 0
        %1785 = vmatpush2.bf16.msra.mxu0 0
        %1786 = vmatprep.mubr.bf16.mxu0 0
        %1787 = vmatmul.mubr.bf16.gmra.mxu0 %v1143
        %v1788 = vpop.f32.mrf.mxu0
        %v1789 = vadd.f32 %v1118, %v1788
        %v1790 = vpop.f32.mrf.mxu0
        %v1791 = vadd.f32 %v1118, %v1790
        %v1792 = vpop.f32.mrf.mxu0
        %v1793 = vadd.f32 %v1123, %v1792
        %v1794 = vpop.f32.mrf.mxu0
        %v1795 = vadd.f32 %v1123, %v1794
        %1796 = vmatprep.mubr.bf16.mxu0 0
        %1797 = vmatmul.mubr.bf16.gmra.mxu0 %v1144
        %v1798 = vpop.f32.mrf.mxu0
        %v1799 = vadd.f32 %v1128, %v1798
        %v1800 = vpop.f32.mrf.mxu0
        %v1801 = vadd.f32 %v1128, %v1800
        %v1802 = vpop.f32.mrf.mxu0
        %v1803 = vadd.f32 %v1133, %v1802
        %v1804 = vpop.f32.mrf.mxu0
        %v1805 = vadd.f32 %v1133, %v1804
        %1806 = vdwg.mxu0
        %v1807 = vadd.f32 %v1483, %v1789
        %v1808 = vadd.f32 %v1484, %v1791
        %v1809 = vadd.f32 %v1485, %v1793
        %v1810 = vadd.f32 %v1486, %v1795
        %v1811 = vadd.f32 %v1487, %v1799
        %v1812 = vadd.f32 %v1488, %v1801
        %v1813 = vadd.f32 %v1489, %v1803
        %v1814 = vadd.f32 %v1490, %v1805
        %s1815 = scalar_lea.vmem %s274, 64 [#allocation2]
        %1816 = vst [vmem:[%s1815] sm:$0xff] %v1807
        %1817 = vst [vmem:[%s1815 + $0x8] sm:$0xff] %v1808
        %1818 = vst [vmem:[%s1815 + $0x10] sm:$0xff] %v1809
        %1819 = vst [vmem:[%s1815 + $0x18] sm:$0xff] %v1810
        %1820 = vst [vmem:[%s1815 + $0x20] sm:$0xff] %v1811
        %1821 = vst [vmem:[%s1815 + $0x28] sm:$0xff] %v1812
        %1822 = vst [vmem:[%s1815 + $0x30] sm:$0xff] %v1813
        %1823 = vst [vmem:[%s1815 + $0x38] sm:$0xff] %v1814
        %s1824 = sand.u32 %s181, 1
        %s1825 = scalar_lea.sflag [#allocation3], %s1824
        %s1826 = sand.u32 %s181, 1
        %s1827 = smul.addr %s1826, 128
        %s1828 = scalar_lea.vmem [#allocation2], %s1827
        // Predicated region
        $region49: #{tpu_custom_call.1} parent=47 // pred_check
          %p1829 = pneg %p191
        $region50: #{tpu_custom_call.1} parent=47 // pred_check_branch
          %1831 = sbr.rel (%p1829) target = $region52
        $region51: #{tpu_custom_call.1} parent=47 // pred_region
          %s1832 = smul.u32 2, %s21
          %s1834 = ssub.s32 2048, 2048
          %1835 = vsyncadd %s1825, %s1834
          %s1836 = smul.addr %s1832, 8
          %s1837 = smul.addr %s1836, 128
          %s1838 = scalar_lea.hbm %s7, %s1837
          %s1839 = sshll.u32 %s1828, 4
          %s1840 = int_to_ptr.vmem [resolvable:$true] %s1839
          %1845 = dma.vmem_to_hbm [thread:$0]  %s1840, 2048, %s1838, %s1825, 256, 256, 16
        $region52: #{tpu_custom_call.1} parent=47 // pred_fallthru
          _
      $region48: #{tpu_custom_call.1} parent=5 // pred_fallthru
        _
      %p1846 = scmp.le.s32.totalorder 2, %s16
      // Predicated region
      $region53: #{tpu_custom_call.1} parent=5 // pred_check
        %p1847 = pneg %p1846
      $region54: #{tpu_custom_call.1} parent=5 // pred_check_branch
        %1849 = sbr.rel (%p1847) target = $region56
      $region55: #{tpu_custom_call.1} parent=5 // pred_region
        %s1850 = ssub.s32 %s16, 2
        // Predicated region
        $region57: #{tpu_custom_call.1} parent=55 // pred_check
          %p1851 = pneg %p197
        $region58: #{tpu_custom_call.1} parent=55 // pred_check_branch
          %1853 = sbr.rel (%p1851) target = $region60
        $region59: #{tpu_custom_call.1} parent=55 // pred_region
          %s1854 = sand.u32 %s182, 1
          %s1855 = scalar_lea.sflag [#allocation3], %s1854
          %s1856 = sand.u32 %s182, 1
          %s1857 = smul.addr %s1856, 128
          %s1858 = scalar_lea.vmem [#allocation2], %s1857
          %1859 = dma.done %s1855, 2048
        $region60: #{tpu_custom_call.1} parent=55 // pred_fallthru
          _
      $region56: #{tpu_custom_call.1} parent=5 // pred_fallthru
        _
    $region6: #{tpu_custom_call.1} parent=1 // loop_footer
      %s20 = sadd.s32 1, %s16
    $region7: #{tpu_custom_call.1} parent=1 // loop_footer_branch
      %15 = sbr.rel target = $region3
    $region8: #{tpu_custom_call.1} parent=1 // loop_exit
      _
    %1860 = vsyncpa [#allocation3], 1
    %s1861 = scalar_lea.sflag [#allocation3], 1
    %1862 = vsyncpa %s1861, 1

</llo_original>
